<compile_context>
chip_gen: v5e
topology: v5e:2x2
jax: 0.10.0
libtpu: 0.0.40
codegen_flags: <defaults>
</compile_context>

<pallas_src>
from collections import namedtuple

import numpy as np
import jax
import jax.numpy as jnp
from jax import lax
from jax.experimental import pallas as pl
from jax.experimental.pallas import tpu as pltpu

BackboneDistanceEmbeddingOutput = namedtuple(
    "BackboneDistanceEmbeddingOutput",
    ["pos3d_emb", "positions", "neighbour_positions", "neighbour_distances",
     "edge_index", "full_edge_index"],
)

_GATHER_LANES = 128   # lane-padded RHS slab for the MXU one-hot gather


def _round_up(x, m):
    return ((x + m - 1) // m) * m


def _make_bde_kernel(n_real, tm, k, half):
    """Row-tiled kernel: one grid step handles `tm` query rows."""
    BIG = 1e30   # Python float -> jaxpr literal (no captured constants)

    # Packed-output lane offsets (Python constants -> static slice stores).
    o_sin3 = 0
    o_cos3 = o_sin3 + 3 * half
    o_loc = o_cos3 + 3 * half
    o_sink = o_loc + 3 * k
    o_cosk = o_sink + k * half
    o_idx = o_cosk + k * half

    def kernel(pos_ref, pos_t_ref, cols_ref, rot_ref, inv_freq_ref, out_ref):
        n_pad = pos_t_ref.shape[1]

        pos = pos_ref[...]               # [tm, 3]     query translations
        rot = rot_ref[...]               # [tm, 9]     rot[n, 3*b+i] = R[n, b, i]
        inv_freq = inv_freq_ref[...]     # [1, half]
        pos_cols = cols_ref[...]         # [n_pad, 128]  x,y,z in lanes 0..2
        prow = [pos_t_ref[c:c + 1, :] for c in range(3)]   # 3 x [1, n_pad]

        # ---- pairwise squared distances, diff-form (argsort parity) --------
        # TODO(synk): for very long sequences (8k+ residues), restructure this
        #             and the kNN loop to iterate over column chunks with a
        #             running top-k so scratch is [tm, chunk], not [tm, n_pad].
        dx = pos[:, 0:1] - prow[0]
        d2 = dx * dx
        for c in (1, 2):
            diff = pos[:, c:c + 1] - prow[c]
            d2 = d2 + diff * diff

        col = lax.broadcasted_iota(jnp.int32, (tm, n_pad), 1)
        row_ids = (lax.broadcasted_iota(jnp.int32, (tm, 1), 0)
                   + pl.program_id(0) * tm)                  # [tm, 1]
        invalid = col == row_ids                             # loop=False (self)
        if n_real < n_pad:
            invalid = invalid | (col >= n_real)              # padded columns
        d2 = jnp.where(invalid, BIG, d2)

        # ---- kNN: k iterative arg-mins; gather coordinates on the MXU -------
        # idx-min tie-break kept for parity with numpy stable argsort.
        idx_cols = []
        nbr_cols = [[], [], []]
        for _ in range(k):
            minval = jnp.min(d2, axis=-1, keepdims=True)                   # [tm,1]
            idx = jnp.min(jnp.where(d2 <= minval, col, n_pad),
                          axis=-1, keepdims=True)                          # [tm,1]
            sel = col == idx                                               # one-hot
            d2 = jnp.where(sel, BIG, d2)
            gathered = jnp.dot(sel.astype(jnp.float32), pos_cols,
                               preferred_element_type=jnp.float32)         # [tm,128]
            idx_cols.append(idx)
            for c in range(3):
                nbr_cols[c].append(gathered[:, c:c + 1])                   # [tm,1]

        idx_all = jnp.concatenate(idx_cols, axis=1)                        # [tm,k]
        nbr = [jnp.concatenate(nbr_cols[c], axis=1) for c in range(3)]     # 3x[tm,k]

        # ---- K-batched local-frame transform: R^T @ (p_j - t) --------------
        diff = [nbr[c] - pos[:, c:c + 1] for c in range(3)]                # 3x[tm,k]
        loc = []
        for i in range(3):
            acc = rot[:, i:i + 1] * diff[0]
            acc = acc + rot[:, 3 + i:4 + i] * diff[1]
            acc = acc + rot[:, 6 + i:7 + i] * diff[2]
            loc.append(acc)                                                # [tm,k]
        dist = jnp.sqrt(loc[0] * loc[0] + loc[1] * loc[1] + loc[2] * loc[2])

        # ---- batched sinusoidal encodings (one sin/cos per wide slab) ------
        args3 = jnp.concatenate(
            [pos[:, d:d + 1] * inv_freq for d in range(3)], axis=1)        # [tm,3*half]
        argsk = jnp.concatenate(
            [dist[:, q:q + 1] * inv_freq for q in range(k)], axis=1)       # [tm,k*half]

        # ---- static lane-slice stores into the packed output block ---------
        out_ref[:, o_sin3:o_sin3 + 3 * half] = jnp.sin(args3)
        out_ref[:, o_cos3:o_cos3 + 3 * half] = jnp.cos(args3)
        for c in range(3):
            out_ref[:, o_loc + c * k:o_loc + (c + 1) * k] = loc[c]
        out_ref[:, o_sink:o_sink + k * half] = jnp.sin(argsk)
        out_ref[:, o_cosk:o_cosk + k * half] = jnp.cos(argsk)
        out_ref[:, o_idx:o_idx + k] = idx_all.astype(jnp.float32)

    return kernel


def backbone_distance_embedding(affines, num_neighbours=4,
                                position_encoding_dim=16, block_rows=256):
    """affines: [N, 3, 4] float32 (rotation = [..., :3], translation = [..., 3])."""
    k = num_neighbours
    ped = position_encoding_dim
    half = ped // 2
    n = affines.shape[0]
    assert n >= 2 and k <= n - 1, "k-NN graph needs at least k+1 nodes"
    assert n < 2 ** 24, "edge indices round-trip exactly through float32 only for N < 2^24"

    affines = affines.astype(jnp.float32)
    positions = affines[..., 3]                           # [n, 3]
    rot_flat = affines[..., :3].reshape(n, 9)             # [n, 9]

    # Row-tile size: multiple of 8, capped so (a) the grid has >= 2 tiles
    # (v7x megacore) and (b) in-kernel [tm, n_pad] temporaries fit VMEM (v7x
    # has only 64 MiB per TensorCore).
    n8 = _round_up(n, 8)
    tm = min(_round_up(block_rows, 8), n8)
    if n8 >= 16:
        tm = min(tm, _round_up((n8 + 1) // 2, 8))
    slab_budget = 24 * 1024 * 1024                        # ~6-8 live [tm,n_pad] slabs
    tm_cap = max(8, (slab_budget // (8 * 4 * n8)) // 8 * 8)
    tm = max(8, min(tm, tm_cap))
    n_pad = _round_up(n, tm)
    grid = (n_pad // tm,)

    pad = n_pad - n
    if pad:
        pos_p = jnp.concatenate(
            [positions, jnp.full((pad, 3), 1e6, jnp.float32)], axis=0)
        rot_p = jnp.concatenate(
            [rot_flat, jnp.zeros((pad, 9), jnp.float32)], axis=0)
    else:
        pos_p, rot_p = positions, rot_flat
    pos_t = pos_p.T                                        # [3, n_pad]
    # Resident lane-padded coordinate slab for the MXU one-hot gather.
    pos_cols = jnp.zeros((n_pad, _GATHER_LANES), jnp.float32).at[:, :3].set(pos_p)

    inv_freq = (1.0 / (10000.0 ** (jnp.arange(0, ped, 2, dtype=jnp.float32) / ped))
                ).reshape(1, half)

    width = 6 * half + 3 * k + 2 * k * half + k            # packed payload width
    w_pad = _round_up(width, 128)                          # lane-dense output slab

    kernel = _make_bde_kernel(n, tm, k, half)

    grid_spec = pltpu.PrefetchScalarGridSpec(
        num_scalar_prefetch=0,
        grid=grid,
        in_specs=[
            pl.BlockSpec((tm, 3), lambda i: (i, 0)),             # query positions tile
            pl.BlockSpec((3, n_pad), lambda i: (0, 0)),          # all positions (rows)
            pl.BlockSpec((n_pad, _GATHER_LANES), lambda i: (0, 0)),  # gather slab
            pl.BlockSpec((tm, 9), lambda i: (i, 0)),             # rotations tile
            pl.BlockSpec((1, half), lambda i: (0, 0)),           # inv_freq (resident)
        ],
        out_specs=pl.BlockSpec((tm, w_pad), lambda i: (i, 0)),
    )

    # VMEM limit computed from the tile (stay well under v7x's 64 MiB/TC).
    temps = 8 * tm * n_pad * 4                              # [tm,n_pad] slabs
    resident = 2 * (n_pad * _GATHER_LANES * 4) + 2 * (8 * n_pad * 4)
    io = 2 * tm * (w_pad + 3 + 9) * 4
    vmem_limit = int(min(40 * 1024 * 1024,
                         max(12 * 1024 * 1024, (temps + resident + io) * 5 // 4)))

    cost = pl.CostEstimate(
        flops=int(n_pad) * int(n_pad) * (2 * _GATHER_LANES * k + 12),
        transcendentals=2 * int(n_pad) * (3 + k) * half,
        bytes_accessed=int(4 * (pos_p.size + pos_t.size + pos_cols.size
                                + rot_p.size + inv_freq.size + n_pad * w_pad)),
    )

    packed = pl.pallas_call(
        kernel,
        out_shape=jax.ShapeDtypeStruct((n_pad, w_pad), jnp.float32),
        grid_spec=grid_spec,
        compiler_params=pltpu.CompilerParams(
            dimension_semantics=("parallel",),              # shard row tiles over TCs
            vmem_limit_bytes=vmem_limit),
        cost_estimate=cost,
    )(pos_p, pos_t, pos_cols, rot_p, inv_freq)

    packed = packed[:n]

    # ---- unpack the lane-dense slab (layout plumbing, plain JAX) -----------
    o = 0
    sin3 = packed[:, o:o + 3 * half]; o += 3 * half
    cos3 = packed[:, o:o + 3 * half]; o += 3 * half
    loc0 = packed[:, o:o + k]; o += k
    loc1 = packed[:, o:o + k]; o += k
    loc2 = packed[:, o:o + k]; o += k
    sink = packed[:, o:o + k * half]; o += k * half
    cosk = packed[:, o:o + k * half]; o += k * half
    eidx_f = packed[:, o:o + k]; o += k

    pos3d_emb = jnp.concatenate(
        [sin3.reshape(n, 3, half), cos3.reshape(n, 3, half)], axis=-1
    ).reshape(n, 3 * ped)
    neighbour_positions = jnp.stack([loc0, loc1, loc2], axis=-1)           # [n,k,3]
    neighbour_distances = jnp.concatenate(
        [sink.reshape(n, k, half), cosk.reshape(n, k, half)], axis=-1)     # [n,k,ped]
    # TODO(synk): torch returns int64 edge indices; int32 used here (TPU-native).
    edge_index = eidx_f.astype(jnp.int32)                                  # [n,k]
    # full_edge_index: row 0 = source (neighbour), row 1 = target (centre node)
    full_edge_index = jnp.stack(
        [edge_index.reshape(-1),
         jnp.repeat(jnp.arange(n, dtype=jnp.int32), k)], axis=0)           # [2,n*k]

    return BackboneDistanceEmbeddingOutput(
        pos3d_emb=pos3d_emb,
        positions=positions,
        neighbour_positions=neighbour_positions,
        neighbour_distances=neighbour_distances,
        edge_index=edge_index,
        full_edge_index=full_edge_index,
    )


def _reference_numpy(affines, k, ped):
    aff = np.asarray(affines, dtype=np.float64)
    pos = aff[..., 3]
    rot = aff[..., :3]
    n = pos.shape[0]
    # kNN distances computed in float32 to match the kernel arithmetic.
    pos32 = pos.astype(np.float32)
    d2 = ((pos32[:, None, :] - pos32[None, :, :]) ** 2).sum(-1)
    np.fill_diagonal(d2, np.inf)
    eidx = np.argsort(d2, axis=-1, kind="stable")[:, :k]
    nbr = pos[eidx]                                        # [n,k,3]
    diff = nbr - pos[:, None, :]
    local = np.einsum("nbi,nkb->nki", rot, diff)           # R^T (p_j - t_n)
    dist = np.linalg.norm(local, axis=-1)
    inv_freq = 1.0 / (10000.0 ** (np.arange(0, ped, 2) / ped))

    def enc(x):
        a = x[..., None] * inv_freq
        return np.concatenate([np.sin(a), np.cos(a)], axis=-1)

    return enc(pos).reshape(n, 3 * ped), local, enc(dist), eidx


if __name__ == "__main__":
    N, K, PED = 60, 4, 16        # 60 rows -> exercises both tiling and padding

    key = jax.random.PRNGKey(0)
    k1, k2 = jax.random.split(key)

    # deterministic random rigid frames (Gram-Schmidt rotations + translations)
    raw = jax.random.normal(k1, (N, 3, 3), dtype=jnp.float32)
    a, b = raw[:, 0], raw[:, 1]
    e1 = a / jnp.linalg.norm(a, axis=-1, keepdims=True)
    u2 = b - jnp.sum(e1 * b, axis=-1, keepdims=True) * e1
    e2 = u2 / jnp.linalg.norm(u2, axis=-1, keepdims=True)
    e3 = jnp.cross(e1, e2)
    R = jnp.stack([e1, e2, e3], axis=-2)                        # [N,3,3], det=+1
    t = 10.0 * jax.random.normal(k2, (N, 3), dtype=jnp.float32)
    affines = jnp.concatenate([R, t[..., None]], axis=-1)       # [N,3,4]

    out = backbone_distance_embedding(affines, num_neighbours=K,
                                      position_encoding_dim=PED,
                                      block_rows=16)            # 4 row tiles
    out = jax.block_until_ready(out)

    # correctness check against a pure-numpy reference
    ref_pos3d, ref_local, ref_ndist, ref_eidx = _reference_numpy(affines, K, PED)
    assert np.array_equal(np.asarray(out.edge_index), ref_eidx.astype(np.int32))
    np.testing.assert_allclose(np.asarray(out.pos3d_emb), ref_pos3d,
                               rtol=1e-3, atol=2e-3)
    np.testing.assert_allclose(np.asarray(out.neighbour_positions), ref_local,
                               rtol=1e-3, atol=2e-3)
    np.testing.assert_allclose(np.asarray(out.neighbour_distances), ref_ndist,
                               rtol=1e-3, atol=2e-3)
    assert out.positions.shape == (N, 3)
    assert out.full_edge_index.shape == (2, N * K)

    print("KERNEL_OK")
</pallas_src>

<mosaic_0001>
module attributes {stable_mosaic.version = 11 : i64} {
  func.func @kernel(%arg0: i32, %arg1: memref<16x3xf32, #tpu.memory_space<vmem>>, %arg2: memref<3x64xf32, #tpu.memory_space<vmem>>, %arg3: memref<64x128xf32, #tpu.memory_space<vmem>>, %arg4: memref<16x9xf32, #tpu.memory_space<vmem>>, %arg5: memref<1x8xf32, #tpu.memory_space<vmem>>, %arg6: memref<16x128xf32, #tpu.memory_space<vmem>>) attributes {dimension_semantics = [#tpu.dimension_semantics<parallel>], iteration_bounds = array<i64: 4>, scalar_prefetch = 0 : i64, scratch_operands = 0 : i64, tpu.core_type = #tpu.core_type<tc>, window_params = [{transform_indices = @transform_0, window_bounds = array<i64: 16, 3>}, {pipeline_mode = #tpu.pipeline_mode<synchronous>, transform_indices = @transform_1, window_bounds = array<i64: 3, 64>}, {pipeline_mode = #tpu.pipeline_mode<synchronous>, transform_indices = @transform_2, window_bounds = array<i64: 64, 128>}, {transform_indices = @transform_3, window_bounds = array<i64: 16, 9>}, {pipeline_mode = #tpu.pipeline_mode<synchronous>, transform_indices = @transform_4, window_bounds = array<i64: 1, 8>}, {transform_indices = @transform_5, window_bounds = array<i64: 16, 128>}]} {
    %c0 = arith.constant 0 : index
    %c0_0 = arith.constant 0 : index
    %0 = vector.load %arg1[%c0, %c0_0] : memref<16x3xf32, #tpu.memory_space<vmem>>, vector<16x3xf32>
    %c0_1 = arith.constant 0 : index
    %c0_2 = arith.constant 0 : index
    %1 = vector.load %arg4[%c0_1, %c0_2] : memref<16x9xf32, #tpu.memory_space<vmem>>, vector<16x9xf32>
    %c0_3 = arith.constant 0 : index
    %c0_4 = arith.constant 0 : index
    %2 = vector.load %arg5[%c0_3, %c0_4] : memref<1x8xf32, #tpu.memory_space<vmem>>, vector<1x8xf32>
    %c0_5 = arith.constant 0 : index
    %c0_6 = arith.constant 0 : index
    %3 = vector.load %arg3[%c0_5, %c0_6] : memref<64x128xf32, #tpu.memory_space<vmem>>, vector<64x128xf32>
    %c0_7 = arith.constant 0 : index
    %c0_8 = arith.constant 0 : index
    %4 = vector.load %arg2[%c0_7, %c0_8] : memref<3x64xf32, #tpu.memory_space<vmem>>, vector<1x64xf32>
    %c1 = arith.constant 1 : index
    %c0_9 = arith.constant 0 : index
    %5 = vector.load %arg2[%c1, %c0_9] : memref<3x64xf32, #tpu.memory_space<vmem>>, vector<1x64xf32>
    %c2 = arith.constant 2 : index
    %c0_10 = arith.constant 0 : index
    %6 = vector.load %arg2[%c2, %c0_10] : memref<3x64xf32, #tpu.memory_space<vmem>>, vector<1x64xf32>
    %7 = vector.extract_strided_slice %0 {offsets = [0, 0], sizes = [16, 1], strides = [1, 1]} : vector<16x3xf32> to vector<16x1xf32>
    %8 = vector.broadcast %7 : vector<16x1xf32> to vector<16x64xf32>
    %9 = vector.broadcast %4 : vector<1x64xf32> to vector<16x64xf32>
    %10 = arith.subf %8, %9 : vector<16x64xf32>
    %11 = arith.mulf %10, %10 : vector<16x64xf32>
    %12 = vector.extract_strided_slice %0 {offsets = [0, 1], sizes = [16, 1], strides = [1, 1]} : vector<16x3xf32> to vector<16x1xf32>
    %13 = vector.broadcast %12 : vector<16x1xf32> to vector<16x64xf32>
    %14 = vector.broadcast %5 : vector<1x64xf32> to vector<16x64xf32>
    %15 = arith.subf %13, %14 : vector<16x64xf32>
    %16 = arith.mulf %15, %15 : vector<16x64xf32>
    %17 = arith.addf %11, %16 : vector<16x64xf32>
    %18 = vector.extract_strided_slice %0 {offsets = [0, 2], sizes = [16, 1], strides = [1, 1]} : vector<16x3xf32> to vector<16x1xf32>
    %19 = vector.broadcast %18 : vector<16x1xf32> to vector<16x64xf32>
    %20 = vector.broadcast %6 : vector<1x64xf32> to vector<16x64xf32>
    %21 = arith.subf %19, %20 : vector<16x64xf32>
    %22 = arith.mulf %21, %21 : vector<16x64xf32>
    %23 = arith.addf %17, %22 : vector<16x64xf32>
    %24 = tpu.iota {dimensions = array<i32: 1>} : vector<16x64xi32>
    %25 = tpu.iota {dimensions = array<i32: 0>} : vector<16x1xi32>
    %c16_i32 = arith.constant 16 : i32
    %26 = arith.muli %arg0, %c16_i32 : i32
    %27 = vector.broadcast %26 : i32 to vector<16x1xi32>
    %28 = arith.addi %25, %27 : vector<16x1xi32>
    %29 = vector.broadcast %28 : vector<16x1xi32> to vector<16x64xi32>
    %30 = arith.cmpi eq, %24, %29 : vector<16x64xi32>
    %c60_i32 = arith.constant 60 : i32
    %31 = vector.broadcast %c60_i32 : i32 to vector<16x64xi32>
    %32 = arith.cmpi sge, %24, %31 : vector<16x64xi32>
    %33 = arith.ori %30, %32 : vector<16x64xi1>
    %cst = arith.constant 1.000000e+30 : f32
    %34 = vector.broadcast %cst : f32 to vector<16x64xf32>
    %35 = arith.select %33, %34, %23 : vector<16x64xi1>, vector<16x64xf32>
    %cst_11 = arith.constant dense<0x7F800000> : vector<16xf32>
    %36 = vector.multi_reduction <minimumf>, %35, %cst_11 [1] : vector<16x64xf32> to vector<16xf32>
    %37 = vector.shape_cast %36 : vector<16xf32> to vector<16x1xf32>
    %38 = vector.broadcast %37 : vector<16x1xf32> to vector<16x64xf32>
    %39 = arith.cmpf ole, %35, %38 : vector<16x64xf32>
    %c64_i32 = arith.constant 64 : i32
    %40 = vector.broadcast %c64_i32 : i32 to vector<16x64xi32>
    %41 = arith.select %39, %24, %40 : vector<16x64xi1>, vector<16x64xi32>
    %cst_12 = arith.constant dense<2147483647> : vector<16xi32>
    %42 = vector.multi_reduction <minsi>, %41, %cst_12 [1] : vector<16x64xi32> to vector<16xi32>
    %43 = vector.shape_cast %42 : vector<16xi32> to vector<16x1xi32>
    %44 = vector.broadcast %43 : vector<16x1xi32> to vector<16x64xi32>
    %45 = arith.cmpi eq, %24, %44 : vector<16x64xi32>
    %cst_13 = arith.constant 1.000000e+30 : f32
    %46 = vector.broadcast %cst_13 : f32 to vector<16x64xf32>
    %47 = arith.select %45, %46, %35 : vector<16x64xi1>, vector<16x64xf32>
    %48 = arith.extui %45 : vector<16x64xi1> to vector<16x64xi32>
    %49 = arith.sitofp %48 : vector<16x64xi32> to vector<16x64xf32>
    %cst_14 = arith.constant dense<0.000000e+00> : vector<16x128xf32>
    %50 = tpu.matmul %49, %3, %cst_14 {dimension_numbers = #tpu.dot_dimension_numbers<[1], [0], [0], [1], [0, 0, 1, 1], [], []>} : vector<16x64xf32>, vector<64x128xf32>, vector<16x128xf32> -> vector<16x128xf32>
    %51 = vector.extract_strided_slice %50 {offsets = [0, 0], sizes = [16, 1], strides = [1, 1]} : vector<16x128xf32> to vector<16x1xf32>
    %52 = vector.extract_strided_slice %50 {offsets = [0, 1], sizes = [16, 1], strides = [1, 1]} : vector<16x128xf32> to vector<16x1xf32>
    %53 = vector.extract_strided_slice %50 {offsets = [0, 2], sizes = [16, 1], strides = [1, 1]} : vector<16x128xf32> to vector<16x1xf32>
    %cst_15 = arith.constant dense<0x7F800000> : vector<16xf32>
    %54 = vector.multi_reduction <minimumf>, %47, %cst_15 [1] : vector<16x64xf32> to vector<16xf32>
    %55 = vector.shape_cast %54 : vector<16xf32> to vector<16x1xf32>
    %56 = vector.broadcast %55 : vector<16x1xf32> to vector<16x64xf32>
    %57 = arith.cmpf ole, %47, %56 : vector<16x64xf32>
    %c64_i32_16 = arith.constant 64 : i32
    %58 = vector.broadcast %c64_i32_16 : i32 to vector<16x64xi32>
    %59 = arith.select %57, %24, %58 : vector<16x64xi1>, vector<16x64xi32>
    %cst_17 = arith.constant dense<2147483647> : vector<16xi32>
    %60 = vector.multi_reduction <minsi>, %59, %cst_17 [1] : vector<16x64xi32> to vector<16xi32>
    %61 = vector.shape_cast %60 : vector<16xi32> to vector<16x1xi32>
    %62 = vector.broadcast %61 : vector<16x1xi32> to vector<16x64xi32>
    %63 = arith.cmpi eq, %24, %62 : vector<16x64xi32>
    %cst_18 = arith.constant 1.000000e+30 : f32
    %64 = vector.broadcast %cst_18 : f32 to vector<16x64xf32>
    %65 = arith.select %63, %64, %47 : vector<16x64xi1>, vector<16x64xf32>
    %66 = arith.extui %63 : vector<16x64xi1> to vector<16x64xi32>
    %67 = arith.sitofp %66 : vector<16x64xi32> to vector<16x64xf32>
    %cst_19 = arith.constant dense<0.000000e+00> : vector<16x128xf32>
    %68 = tpu.matmul %67, %3, %cst_19 {dimension_numbers = #tpu.dot_dimension_numbers<[1], [0], [0], [1], [0, 0, 1, 1], [], []>} : vector<16x64xf32>, vector<64x128xf32>, vector<16x128xf32> -> vector<16x128xf32>
    %69 = vector.extract_strided_slice %68 {offsets = [0, 0], sizes = [16, 1], strides = [1, 1]} : vector<16x128xf32> to vector<16x1xf32>
    %70 = vector.extract_strided_slice %68 {offsets = [0, 1], sizes = [16, 1], strides = [1, 1]} : vector<16x128xf32> to vector<16x1xf32>
    %71 = vector.extract_strided_slice %68 {offsets = [0, 2], sizes = [16, 1], strides = [1, 1]} : vector<16x128xf32> to vector<16x1xf32>
    %cst_20 = arith.constant dense<0x7F800000> : vector<16xf32>
    %72 = vector.multi_reduction <minimumf>, %65, %cst_20 [1] : vector<16x64xf32> to vector<16xf32>
    %73 = vector.shape_cast %72 : vector<16xf32> to vector<16x1xf32>
    %74 = vector.broadcast %73 : vector<16x1xf32> to vector<16x64xf32>
    %75 = arith.cmpf ole, %65, %74 : vector<16x64xf32>
    %c64_i32_21 = arith.constant 64 : i32
    %76 = vector.broadcast %c64_i32_21 : i32 to vector<16x64xi32>
    %77 = arith.select %75, %24, %76 : vector<16x64xi1>, vector<16x64xi32>
    %cst_22 = arith.constant dense<2147483647> : vector<16xi32>
    %78 = vector.multi_reduction <minsi>, %77, %cst_22 [1] : vector<16x64xi32> to vector<16xi32>
    %79 = vector.shape_cast %78 : vector<16xi32> to vector<16x1xi32>
    %80 = vector.broadcast %79 : vector<16x1xi32> to vector<16x64xi32>
    %81 = arith.cmpi eq, %24, %80 : vector<16x64xi32>
    %cst_23 = arith.constant 1.000000e+30 : f32
    %82 = vector.broadcast %cst_23 : f32 to vector<16x64xf32>
    %83 = arith.select %81, %82, %65 : vector<16x64xi1>, vector<16x64xf32>
    %84 = arith.extui %81 : vector<16x64xi1> to vector<16x64xi32>
    %85 = arith.sitofp %84 : vector<16x64xi32> to vector<16x64xf32>
    %cst_24 = arith.constant dense<0.000000e+00> : vector<16x128xf32>
    %86 = tpu.matmul %85, %3, %cst_24 {dimension_numbers = #tpu.dot_dimension_numbers<[1], [0], [0], [1], [0, 0, 1, 1], [], []>} : vector<16x64xf32>, vector<64x128xf32>, vector<16x128xf32> -> vector<16x128xf32>
    %87 = vector.extract_strided_slice %86 {offsets = [0, 0], sizes = [16, 1], strides = [1, 1]} : vector<16x128xf32> to vector<16x1xf32>
    %88 = vector.extract_strided_slice %86 {offsets = [0, 1], sizes = [16, 1], strides = [1, 1]} : vector<16x128xf32> to vector<16x1xf32>
    %89 = vector.extract_strided_slice %86 {offsets = [0, 2], sizes = [16, 1], strides = [1, 1]} : vector<16x128xf32> to vector<16x1xf32>
    %cst_25 = arith.constant dense<0x7F800000> : vector<16xf32>
    %90 = vector.multi_reduction <minimumf>, %83, %cst_25 [1] : vector<16x64xf32> to vector<16xf32>
    %91 = vector.shape_cast %90 : vector<16xf32> to vector<16x1xf32>
    %92 = vector.broadcast %91 : vector<16x1xf32> to vector<16x64xf32>
    %93 = arith.cmpf ole, %83, %92 : vector<16x64xf32>
    %c64_i32_26 = arith.constant 64 : i32
    %94 = vector.broadcast %c64_i32_26 : i32 to vector<16x64xi32>
    %95 = arith.select %93, %24, %94 : vector<16x64xi1>, vector<16x64xi32>
    %cst_27 = arith.constant dense<2147483647> : vector<16xi32>
    %96 = vector.multi_reduction <minsi>, %95, %cst_27 [1] : vector<16x64xi32> to vector<16xi32>
    %97 = vector.shape_cast %96 : vector<16xi32> to vector<16x1xi32>
    %98 = vector.broadcast %97 : vector<16x1xi32> to vector<16x64xi32>
    %99 = arith.cmpi eq, %24, %98 : vector<16x64xi32>
    %100 = arith.extui %99 : vector<16x64xi1> to vector<16x64xi32>
    %101 = arith.sitofp %100 : vector<16x64xi32> to vector<16x64xf32>
    %cst_28 = arith.constant dense<0.000000e+00> : vector<16x128xf32>
    %102 = tpu.matmul %101, %3, %cst_28 {dimension_numbers = #tpu.dot_dimension_numbers<[1], [0], [0], [1], [0, 0, 1, 1], [], []>} : vector<16x64xf32>, vector<64x128xf32>, vector<16x128xf32> -> vector<16x128xf32>
    %103 = vector.extract_strided_slice %102 {offsets = [0, 0], sizes = [16, 1], strides = [1, 1]} : vector<16x128xf32> to vector<16x1xf32>
    %104 = vector.extract_strided_slice %102 {offsets = [0, 1], sizes = [16, 1], strides = [1, 1]} : vector<16x128xf32> to vector<16x1xf32>
    %105 = vector.extract_strided_slice %102 {offsets = [0, 2], sizes = [16, 1], strides = [1, 1]} : vector<16x128xf32> to vector<16x1xf32>
    %106 = tpu.concatenate %43, %61, %79, %97 in 1 : vector<16x1xi32>, vector<16x1xi32>, vector<16x1xi32>, vector<16x1xi32> -> vector<16x4xi32>
    %107 = tpu.concatenate %51, %69, %87, %103 in 1 : vector<16x1xf32>, vector<16x1xf32>, vector<16x1xf32>, vector<16x1xf32> -> vector<16x4xf32>
    %108 = tpu.concatenate %52, %70, %88, %104 in 1 : vector<16x1xf32>, vector<16x1xf32>, vector<16x1xf32>, vector<16x1xf32> -> vector<16x4xf32>
    %109 = tpu.concatenate %53, %71, %89, %105 in 1 : vector<16x1xf32>, vector<16x1xf32>, vector<16x1xf32>, vector<16x1xf32> -> vector<16x4xf32>
    %110 = vector.extract_strided_slice %0 {offsets = [0, 0], sizes = [16, 1], strides = [1, 1]} : vector<16x3xf32> to vector<16x1xf32>
    %111 = vector.broadcast %110 : vector<16x1xf32> to vector<16x4xf32>
    %112 = arith.subf %107, %111 : vector<16x4xf32>
    %113 = vector.extract_strided_slice %0 {offsets = [0, 1], sizes = [16, 1], strides = [1, 1]} : vector<16x3xf32> to vector<16x1xf32>
    %114 = vector.broadcast %113 : vector<16x1xf32> to vector<16x4xf32>
    %115 = arith.subf %108, %114 : vector<16x4xf32>
    %116 = vector.extract_strided_slice %0 {offsets = [0, 2], sizes = [16, 1], strides = [1, 1]} : vector<16x3xf32> to vector<16x1xf32>
    %117 = vector.broadcast %116 : vector<16x1xf32> to vector<16x4xf32>
    %118 = arith.subf %109, %117 : vector<16x4xf32>
    %119 = vector.extract_strided_slice %1 {offsets = [0, 0], sizes = [16, 1], strides = [1, 1]} : vector<16x9xf32> to vector<16x1xf32>
    %120 = vector.broadcast %119 : vector<16x1xf32> to vector<16x4xf32>
    %121 = arith.mulf %120, %112 : vector<16x4xf32>
    %122 = vector.extract_strided_slice %1 {offsets = [0, 3], sizes = [16, 1], strides = [1, 1]} : vector<16x9xf32> to vector<16x1xf32>
    %123 = vector.broadcast %122 : vector<16x1xf32> to vector<16x4xf32>
    %124 = arith.mulf %123, %115 : vector<16x4xf32>
    %125 = arith.addf %121, %124 : vector<16x4xf32>
    %126 = vector.extract_strided_slice %1 {offsets = [0, 6], sizes = [16, 1], strides = [1, 1]} : vector<16x9xf32> to vector<16x1xf32>
    %127 = vector.broadcast %126 : vector<16x1xf32> to vector<16x4xf32>
    %128 = arith.mulf %127, %118 : vector<16x4xf32>
    %129 = arith.addf %125, %128 : vector<16x4xf32>
    %130 = vector.extract_strided_slice %1 {offsets = [0, 1], sizes = [16, 1], strides = [1, 1]} : vector<16x9xf32> to vector<16x1xf32>
    %131 = vector.broadcast %130 : vector<16x1xf32> to vector<16x4xf32>
    %132 = arith.mulf %131, %112 : vector<16x4xf32>
    %133 = vector.extract_strided_slice %1 {offsets = [0, 4], sizes = [16, 1], strides = [1, 1]} : vector<16x9xf32> to vector<16x1xf32>
    %134 = vector.broadcast %133 : vector<16x1xf32> to vector<16x4xf32>
    %135 = arith.mulf %134, %115 : vector<16x4xf32>
    %136 = arith.addf %132, %135 : vector<16x4xf32>
    %137 = vector.extract_strided_slice %1 {offsets = [0, 7], sizes = [16, 1], strides = [1, 1]} : vector<16x9xf32> to vector<16x1xf32>
    %138 = vector.broadcast %137 : vector<16x1xf32> to vector<16x4xf32>
    %139 = arith.mulf %138, %118 : vector<16x4xf32>
    %140 = arith.addf %136, %139 : vector<16x4xf32>
    %141 = vector.extract_strided_slice %1 {offsets = [0, 2], sizes = [16, 1], strides = [1, 1]} : vector<16x9xf32> to vector<16x1xf32>
    %142 = vector.broadcast %141 : vector<16x1xf32> to vector<16x4xf32>
    %143 = arith.mulf %142, %112 : vector<16x4xf32>
    %144 = vector.extract_strided_slice %1 {offsets = [0, 5], sizes = [16, 1], strides = [1, 1]} : vector<16x9xf32> to vector<16x1xf32>
    %145 = vector.broadcast %144 : vector<16x1xf32> to vector<16x4xf32>
    %146 = arith.mulf %145, %115 : vector<16x4xf32>
    %147 = arith.addf %143, %146 : vector<16x4xf32>
    %148 = vector.extract_strided_slice %1 {offsets = [0, 8], sizes = [16, 1], strides = [1, 1]} : vector<16x9xf32> to vector<16x1xf32>
    %149 = vector.broadcast %148 : vector<16x1xf32> to vector<16x4xf32>
    %150 = arith.mulf %149, %118 : vector<16x4xf32>
    %151 = arith.addf %147, %150 : vector<16x4xf32>
    %152 = arith.mulf %129, %129 : vector<16x4xf32>
    %153 = arith.mulf %140, %140 : vector<16x4xf32>
    %154 = arith.addf %152, %153 : vector<16x4xf32>
    %155 = arith.mulf %151, %151 : vector<16x4xf32>
    %156 = arith.addf %154, %155 : vector<16x4xf32>
    %157 = math.sqrt %156 : vector<16x4xf32>
    %158 = vector.extract_strided_slice %0 {offsets = [0, 0], sizes = [16, 1], strides = [1, 1]} : vector<16x3xf32> to vector<16x1xf32>
    %159 = vector.broadcast %158 : vector<16x1xf32> to vector<16x8xf32>
    %160 = vector.broadcast %2 : vector<1x8xf32> to vector<16x8xf32>
    %161 = arith.mulf %159, %160 : vector<16x8xf32>
    %162 = vector.extract_strided_slice %0 {offsets = [0, 1], sizes = [16, 1], strides = [1, 1]} : vector<16x3xf32> to vector<16x1xf32>
    %163 = vector.broadcast %162 : vector<16x1xf32> to vector<16x8xf32>
    %164 = vector.broadcast %2 : vector<1x8xf32> to vector<16x8xf32>
    %165 = arith.mulf %163, %164 : vector<16x8xf32>
    %166 = vector.extract_strided_slice %0 {offsets = [0, 2], sizes = [16, 1], strides = [1, 1]} : vector<16x3xf32> to vector<16x1xf32>
    %167 = vector.broadcast %166 : vector<16x1xf32> to vector<16x8xf32>
    %168 = vector.broadcast %2 : vector<1x8xf32> to vector<16x8xf32>
    %169 = arith.mulf %167, %168 : vector<16x8xf32>
    %170 = tpu.concatenate %161, %165, %169 in 1 : vector<16x8xf32>, vector<16x8xf32>, vector<16x8xf32> -> vector<16x24xf32>
    %171 = vector.extract_strided_slice %157 {offsets = [0, 0], sizes = [16, 1], strides = [1, 1]} : vector<16x4xf32> to vector<16x1xf32>
    %172 = vector.broadcast %171 : vector<16x1xf32> to vector<16x8xf32>
    %173 = vector.broadcast %2 : vector<1x8xf32> to vector<16x8xf32>
    %174 = arith.mulf %172, %173 : vector<16x8xf32>
    %175 = vector.extract_strided_slice %157 {offsets = [0, 1], sizes = [16, 1], strides = [1, 1]} : vector<16x4xf32> to vector<16x1xf32>
    %176 = vector.broadcast %175 : vector<16x1xf32> to vector<16x8xf32>
    %177 = vector.broadcast %2 : vector<1x8xf32> to vector<16x8xf32>
    %178 = arith.mulf %176, %177 : vector<16x8xf32>
    %179 = vector.extract_strided_slice %157 {offsets = [0, 2], sizes = [16, 1], strides = [1, 1]} : vector<16x4xf32> to vector<16x1xf32>
    %180 = vector.broadcast %179 : vector<16x1xf32> to vector<16x8xf32>
    %181 = vector.broadcast %2 : vector<1x8xf32> to vector<16x8xf32>
    %182 = arith.mulf %180, %181 : vector<16x8xf32>
    %183 = vector.extract_strided_slice %157 {offsets = [0, 3], sizes = [16, 1], strides = [1, 1]} : vector<16x4xf32> to vector<16x1xf32>
    %184 = vector.broadcast %183 : vector<16x1xf32> to vector<16x8xf32>
    %185 = vector.broadcast %2 : vector<1x8xf32> to vector<16x8xf32>
    %186 = arith.mulf %184, %185 : vector<16x8xf32>
    %187 = tpu.concatenate %174, %178, %182, %186 in 1 : vector<16x8xf32>, vector<16x8xf32>, vector<16x8xf32>, vector<16x8xf32> -> vector<16x32xf32>
    %188 = math.sin %170 : vector<16x24xf32>
    %c0_29 = arith.constant 0 : index
    %c0_30 = arith.constant 0 : index
    %189 = vector.load %arg6[%c0_29, %c0_30] : memref<16x128xf32, #tpu.memory_space<vmem>>, vector<16x24xf32>
    tpu.vector_store %arg6[%c0_29, %c0_30], %188 {strides = array<i32>} : memref<16x128xf32, #tpu.memory_space<vmem>>, vector<16x24xf32>,
    %190 = math.cos %170 : vector<16x24xf32>
    %c0_31 = arith.constant 0 : index
    %c24 = arith.constant 24 : index
    %191 = vector.load %arg6[%c0_31, %c24] : memref<16x128xf32, #tpu.memory_space<vmem>>, vector<16x24xf32>
    tpu.vector_store %arg6[%c0_31, %c24], %190 {strides = array<i32>} : memref<16x128xf32, #tpu.memory_space<vmem>>, vector<16x24xf32>,
    %c0_32 = arith.constant 0 : index
    %c48 = arith.constant 48 : index
    %192 = vector.load %arg6[%c0_32, %c48] : memref<16x128xf32, #tpu.memory_space<vmem>>, vector<16x4xf32>
    tpu.vector_store %arg6[%c0_32, %c48], %129 {strides = array<i32>} : memref<16x128xf32, #tpu.memory_space<vmem>>, vector<16x4xf32>,
    %c0_33 = arith.constant 0 : index
    %c52 = arith.constant 52 : index
    %193 = vector.load %arg6[%c0_33, %c52] : memref<16x128xf32, #tpu.memory_space<vmem>>, vector<16x4xf32>
    tpu.vector_store %arg6[%c0_33, %c52], %140 {strides = array<i32>} : memref<16x128xf32, #tpu.memory_space<vmem>>, vector<16x4xf32>,
    %c0_34 = arith.constant 0 : index
    %c56 = arith.constant 56 : index
    %194 = vector.load %arg6[%c0_34, %c56] : memref<16x128xf32, #tpu.memory_space<vmem>>, vector<16x4xf32>
    tpu.vector_store %arg6[%c0_34, %c56], %151 {strides = array<i32>} : memref<16x128xf32, #tpu.memory_space<vmem>>, vector<16x4xf32>,
    %195 = math.sin %187 : vector<16x32xf32>
    %c0_35 = arith.constant 0 : index
    %c60 = arith.constant 60 : index
    %196 = vector.load %arg6[%c0_35, %c60] : memref<16x128xf32, #tpu.memory_space<vmem>>, vector<16x32xf32>
    tpu.vector_store %arg6[%c0_35, %c60], %195 {strides = array<i32>} : memref<16x128xf32, #tpu.memory_space<vmem>>, vector<16x32xf32>,
    %197 = math.cos %187 : vector<16x32xf32>
    %c0_36 = arith.constant 0 : index
    %c92 = arith.constant 92 : index
    %198 = vector.load %arg6[%c0_36, %c92] : memref<16x128xf32, #tpu.memory_space<vmem>>, vector<16x32xf32>
    tpu.vector_store %arg6[%c0_36, %c92], %197 {strides = array<i32>} : memref<16x128xf32, #tpu.memory_space<vmem>>, vector<16x32xf32>,
    %199 = arith.sitofp %106 : vector<16x4xi32> to vector<16x4xf32>
    %c0_37 = arith.constant 0 : index
    %c124 = arith.constant 124 : index
    %200 = vector.load %arg6[%c0_37, %c124] : memref<16x128xf32, #tpu.memory_space<vmem>>, vector<16x4xf32>
    tpu.vector_store %arg6[%c0_37, %c124], %199 {strides = array<i32>} : memref<16x128xf32, #tpu.memory_space<vmem>>, vector<16x4xf32>,
    return
  }
  func.func @transform_0(%arg0: i32) -> (i32, i32) {
    %c0_i32 = arith.constant 0 : i32
    %c0_i32_0 = arith.constant 0 : i32
    return %arg0, %c0_i32 : i32, i32
  }
  func.func @transform_1(%arg0: i32) -> (i32, i32) {
    %c0_i32 = arith.constant 0 : i32
    %c0_i32_0 = arith.constant 0 : i32
    %c0_i32_1 = arith.constant 0 : i32
    return %c0_i32, %c0_i32_0 : i32, i32
  }
  func.func @transform_2(%arg0: i32) -> (i32, i32) {
    %c0_i32 = arith.constant 0 : i32
    %c0_i32_0 = arith.constant 0 : i32
    %c0_i32_1 = arith.constant 0 : i32
    return %c0_i32, %c0_i32_0 : i32, i32
  }
  func.func @transform_3(%arg0: i32) -> (i32, i32) {
    %c0_i32 = arith.constant 0 : i32
    %c0_i32_0 = arith.constant 0 : i32
    return %arg0, %c0_i32 : i32, i32
  }
  func.func @transform_4(%arg0: i32) -> (i32, i32) {
    %c0_i32 = arith.constant 0 : i32
    %c0_i32_0 = arith.constant 0 : i32
    %c0_i32_1 = arith.constant 0 : i32
    return %c0_i32, %c0_i32_0 : i32, i32
  }
  func.func @transform_5(%arg0: i32) -> (i32, i32) {
    %c0_i32 = arith.constant 0 : i32
    %c0_i32_0 = arith.constant 0 : i32
    return %arg0, %c0_i32 : i32, i32
  }
}

</mosaic_0001>

<llo_original>
// kernel: tpu_custom_call.1
$region0: #{tpu_custom_call.1}
  #allocation0 [shape = 'u32[]', space=smem, size = 0x4, offset = 0x4, fixed_abs, tag = 'smem constant byte address 0x4 - core index']
  #allocation1 [shape = 'u32[72,128]{1,0:T(1,128)}', space=vmem, size = 0x9000, scoped, tag = 'internal scratch']
  %s0 = inlined_call_operand.vmem [shape: f32[64,3], index: 0, kind: input, shape index: {}]
  %s1 = inlined_call_operand.vmem [shape: f32[3,64], index: 1, kind: input, shape index: {}]
  %s2 = inlined_call_operand.vmem [shape: f32[64,128], index: 2, kind: input, shape index: {}]
  %s3 = inlined_call_operand.vmem [shape: f32[64,9], index: 3, kind: input, shape index: {}]
  %s4 = inlined_call_operand.vmem [shape: f32[1,8], index: 4, kind: input, shape index: {}]
  %s5 = inlined_call_operand.hbm [shape: f32[64,128], index: 5, kind: output, shape index: {}]
  %s6 = sld [smem:[#allocation0]]
  $region53: #{tpu_custom_call.1} parent=0
    _
  %s8 = ssub.s32 1, %s6
  %s9 = scalar_select 0, %s8, %s6
  $region1: #{tpu_custom_call.1} parent=0
    #allocation2 [shape = 'u8[16384]{0}', space=vmem, size = 0x4000, scoped, tag = 'output window, operand 0']
    #allocation3 [shape = 's32[2]{0}', space=sflag, size = 0x8, scoped, tag = 'scoped memory for tpu_custom_call.1']
    %10 = vsyncpa [#allocation3], 0
    %s11 = scalar_lea.sflag [#allocation3], 1
    %12 = vsyncpa %s11, 0
    loop: start=0, step=1, limit=6
    $region2: #{tpu_custom_call.1} parent=1 // loop_pre_header
      _
    $region3: #{tpu_custom_call.1} parent=1 // loop_header
      %s14 = sphi 0, %s18
      %p15 = scmp.ge.s32.totalorder %s14, 6
      %s24 = sphi 0, %s26
      %s27 = sphi 0, %s24
      %s28 = sphi 0, %s27
      %s44 = sphi 0, %s28
      %s48 = sphi 0, %s48
      %s50 = sphi 0, %s48
      %s51 = sphi 0, %s50
      %s65 = sphi 0, %s51
      %s69 = sphi 0, %s69
      %s71 = sphi 0, %s69
      %s72 = sphi 0, %s71
      %s86 = sphi 0, %s72
      %s92 = sphi 0, %s94
      %s95 = sphi 0, %s92
      %s96 = sphi 0, %s95
      %s112 = sphi 0, %s96
      %s116 = sphi 0, %s116
      %s118 = sphi 0, %s116
      %s119 = sphi 0, %s118
      %s133 = sphi 0, %s119
      %s139 = sphi 0, %s141
      %s142 = sphi 0, %s139
      %s143 = sphi 0, %s142
      %s159 = sphi 0, %s143
    $region4: #{tpu_custom_call.1} parent=1 // loop_header_branch
      %17 = sbr.rel (%p15) target = $region8
    $region5: #{tpu_custom_call.1} parent=1 // loop_body
      %s19 = ssub.s32 %s14, 1
      %s20 = ssub.s32 %s14, 2
      %s21 = sadd.s32 %s14, 1
      %s22 = ssub.s32 %s14, %s21
      %p23 = scmp.eq.s32.totalorder %s22, 0
      %s25 = sadd.s32 %s24, 1
      %s26 = scalar_select %p23, %s24, %s25
      %p29 = pneg %p23
      %p30 = scmp.eq.s32.totalorder %s14, 3
      %p31 = por %p29, %p30
      %p32 = scmp.ne.s32.totalorder %s24, %s27
      %p33 = scmp.eq.s32.totalorder %s14, 0
      %p34 = por %p32, %p33
      %p35 = scmp.ne.s32.totalorder %s24, %s27
      %p36 = scmp.eq.s32.totalorder %s19, 3
      %p37 = por %p35, %p36
      %p38 = scmp.ne.s32.totalorder %s27, %s28
      %p39 = scmp.eq.s32.totalorder %s19, 0
      %p40 = por %p38, %p39
      %p41 = scmp.ne.s32.totalorder %s27, %s28
      %p42 = scmp.eq.s32.totalorder %s20, 3
      %p43 = por %p41, %p42
      %p45 = scmp.ne.s32.totalorder %s28, %s44
      %p46 = scmp.eq.s32.totalorder %s20, 0
      %p47 = por %p45, %p46
      %s49 = sadd.s32 %s48, 1
      %p52 = scmp.eq.s32.totalorder %s14, 3
      %p53 = scmp.ne.s32.totalorder %s48, %s50
      %p54 = scmp.eq.s32.totalorder %s14, 0
      %p55 = por %p53, %p54
      %p56 = scmp.ne.s32.totalorder %s48, %s50
      %p57 = scmp.eq.s32.totalorder %s19, 3
      %p58 = por %p56, %p57
      %p59 = scmp.ne.s32.totalorder %s50, %s51
      %p60 = scmp.eq.s32.totalorder %s19, 0
      %p61 = por %p59, %p60
      %p62 = scmp.ne.s32.totalorder %s50, %s51
      %p63 = scmp.eq.s32.totalorder %s20, 3
      %p64 = por %p62, %p63
      %p66 = scmp.ne.s32.totalorder %s51, %s65
      %p67 = scmp.eq.s32.totalorder %s20, 0
      %p68 = por %p66, %p67
      %s70 = sadd.s32 %s69, 1
      %p73 = scmp.eq.s32.totalorder %s14, 3
      %p74 = scmp.ne.s32.totalorder %s69, %s71
      %p75 = scmp.eq.s32.totalorder %s14, 0
      %p76 = por %p74, %p75
      %p77 = scmp.ne.s32.totalorder %s69, %s71
      %p78 = scmp.eq.s32.totalorder %s19, 3
      %p79 = por %p77, %p78
      %p80 = scmp.ne.s32.totalorder %s71, %s72
      %p81 = scmp.eq.s32.totalorder %s19, 0
      %p82 = por %p80, %p81
      %p83 = scmp.ne.s32.totalorder %s71, %s72
      %p84 = scmp.eq.s32.totalorder %s20, 3
      %p85 = por %p83, %p84
      %p87 = scmp.ne.s32.totalorder %s72, %s86
      %p88 = scmp.eq.s32.totalorder %s20, 0
      %p89 = por %p87, %p88
      %s90 = ssub.s32 %s14, %s21
      %p91 = scmp.eq.s32.totalorder %s90, 0
      %s93 = sadd.s32 %s92, 1
      %s94 = scalar_select %p91, %s92, %s93
      %p97 = pneg %p91
      %p98 = scmp.eq.s32.totalorder %s14, 3
      %p99 = por %p97, %p98
      %p100 = scmp.ne.s32.totalorder %s92, %s95
      %p101 = scmp.eq.s32.totalorder %s14, 0
      %p102 = por %p100, %p101
      %p103 = scmp.ne.s32.totalorder %s92, %s95
      %p104 = scmp.eq.s32.totalorder %s19, 3
      %p105 = por %p103, %p104
      %p106 = scmp.ne.s32.totalorder %s95, %s96
      %p107 = scmp.eq.s32.totalorder %s19, 0
      %p108 = por %p106, %p107
      %p109 = scmp.ne.s32.totalorder %s95, %s96
      %p110 = scmp.eq.s32.totalorder %s20, 3
      %p111 = por %p109, %p110
      %p113 = scmp.ne.s32.totalorder %s96, %s112
      %p114 = scmp.eq.s32.totalorder %s20, 0
      %p115 = por %p113, %p114
      %s117 = sadd.s32 %s116, 1
      %p120 = scmp.eq.s32.totalorder %s14, 3
      %p121 = scmp.ne.s32.totalorder %s116, %s118
      %p122 = scmp.eq.s32.totalorder %s14, 0
      %p123 = por %p121, %p122
      %p124 = scmp.ne.s32.totalorder %s116, %s118
      %p125 = scmp.eq.s32.totalorder %s19, 3
      %p126 = por %p124, %p125
      %p127 = scmp.ne.s32.totalorder %s118, %s119
      %p128 = scmp.eq.s32.totalorder %s19, 0
      %p129 = por %p127, %p128
      %p130 = scmp.ne.s32.totalorder %s118, %s119
      %p131 = scmp.eq.s32.totalorder %s20, 3
      %p132 = por %p130, %p131
      %p134 = scmp.ne.s32.totalorder %s119, %s133
      %p135 = scmp.eq.s32.totalorder %s20, 0
      %p136 = por %p134, %p135
      %s137 = ssub.s32 %s14, %s21
      %p138 = scmp.eq.s32.totalorder %s137, 0
      %s140 = sadd.s32 %s139, 1
      %s141 = scalar_select %p138, %s139, %s140
      %p144 = pneg %p138
      %p145 = scmp.eq.s32.totalorder %s14, 3
      %p146 = por %p144, %p145
      %p147 = scmp.ne.s32.totalorder %s139, %s142
      %p148 = scmp.eq.s32.totalorder %s14, 0
      %p149 = por %p147, %p148
      %p150 = scmp.ne.s32.totalorder %s139, %s142
      %p151 = scmp.eq.s32.totalorder %s19, 3
      %p152 = por %p150, %p151
      %p153 = scmp.ne.s32.totalorder %s142, %s143
      %p154 = scmp.eq.s32.totalorder %s19, 0
      %p155 = por %p153, %p154
      %p156 = scmp.ne.s32.totalorder %s142, %s143
      %p157 = scmp.eq.s32.totalorder %s20, 3
      %p158 = por %p156, %p157
      %p160 = scmp.ne.s32.totalorder %s143, %s159
      %p161 = scmp.eq.s32.totalorder %s20, 0
      %p162 = por %p160, %p161
      %p163 = scmp.le.s32.totalorder 1, %s14
      %p164 = scmp.lt.s32.totalorder %s14, 5
      %p165 = pnand %p163, %p164
      %p166 = pneg %p165
      // Predicated region
      $region9: #{tpu_custom_call.1} parent=5 // pred_check
        _
      $region10: #{tpu_custom_call.1} parent=5 // pred_check_branch
        %168 = sbr.rel (%p165) target = $region12
      $region11: #{tpu_custom_call.1} parent=5 // pred_region
        %s169 = ssub.s32 %s14, 1
        // Predicated region
        $region13: #{tpu_custom_call.1} parent=11 // pred_check
          %p170 = pneg %p61
        $region14: #{tpu_custom_call.1} parent=11 // pred_check_branch
          %172 = sbr.rel (%p170) target = $region16
        $region15: #{tpu_custom_call.1} parent=11 // pred_region
          _
        $region16: #{tpu_custom_call.1} parent=11 // pred_fallthru
          _
        // Predicated region
        $region17: #{tpu_custom_call.1} parent=11 // pred_check
          %p173 = pneg %p82
        $region18: #{tpu_custom_call.1} parent=11 // pred_check_branch
          %175 = sbr.rel (%p173) target = $region20
        $region19: #{tpu_custom_call.1} parent=11 // pred_region
          _
        $region20: #{tpu_custom_call.1} parent=11 // pred_fallthru
          _
        // Predicated region
        $region21: #{tpu_custom_call.1} parent=11 // pred_check
          %p176 = pneg %p129
        $region22: #{tpu_custom_call.1} parent=11 // pred_check_branch
          %178 = sbr.rel (%p176) target = $region24
        $region23: #{tpu_custom_call.1} parent=11 // pred_region
          _
        $region24: #{tpu_custom_call.1} parent=11 // pred_fallthru
          _
      $region12: #{tpu_custom_call.1} parent=5 // pred_fallthru
        _
      %p179 = scmp.lt.s32.totalorder %s14, 4
      // Predicated region
      $region25: #{tpu_custom_call.1} parent=5 // pred_check
        %p180 = pneg %p179
      $region26: #{tpu_custom_call.1} parent=5 // pred_check_branch
        %182 = sbr.rel (%p180) target = $region28
      $region27: #{tpu_custom_call.1} parent=5 // pred_region
        // Predicated region
        $region29: #{tpu_custom_call.1} parent=27 // pred_check
          %p183 = pneg %p34
        $region30: #{tpu_custom_call.1} parent=27 // pred_check_branch
          %185 = sbr.rel (%p183) target = $region32
        $region31: #{tpu_custom_call.1} parent=27 // pred_region
          %s186 = smul.u32 2, %s14
          %p187 = scmp.lt.s32.totalorder %s186, 7
          %s188 = scalar_select %p187, %s186, 7
          %s189 = smul.addr %s188, 8
          %s190 = scalar_lea.vmem %s0, %s189
          %s191 = smul.u32 2, %s14
        $region32: #{tpu_custom_call.1} parent=27 // pred_fallthru
          _
        // Predicated region
        $region33: #{tpu_custom_call.1} parent=27 // pred_check
          %p192 = pneg %p102
        $region34: #{tpu_custom_call.1} parent=27 // pred_check_branch
          %194 = sbr.rel (%p192) target = $region36
        $region35: #{tpu_custom_call.1} parent=27 // pred_region
          %s195 = smul.u32 2, %s14
          %p196 = scmp.lt.s32.totalorder %s195, 7
          %s197 = scalar_select %p196, %s195, 7
          %s198 = smul.addr %s197, 8
          %s199 = scalar_lea.vmem %s3, %s198
          %s200 = smul.u32 2, %s14
        $region36: #{tpu_custom_call.1} parent=27 // pred_fallthru
          _
      $region28: #{tpu_custom_call.1} parent=5 // pred_fallthru
        _
      %p201 = scmp.le.s32.totalorder 1, %s14
      %p202 = scmp.lt.s32.totalorder %s14, 5
      %p203 = pnand %p201, %p202
      %p204 = pneg %p203
      // Predicated region
      $region37: #{tpu_custom_call.1} parent=5 // pred_check
        _
      $region38: #{tpu_custom_call.1} parent=5 // pred_check_branch
        %206 = sbr.rel (%p203) target = $region40
      $region39: #{tpu_custom_call.1} parent=5 // pred_region
        %s207 = ssub.s32 %s14, 1
        %s208 = smul.u32 2, %s19
        %p209 = scmp.lt.s32.totalorder %s208, 7
        %s210 = scalar_select %p209, %s208, 7
        %s211 = smul.addr %s210, 8
        %s212 = scalar_lea.vmem %s0, %s211
        %p213 = pneg %p40
        %p214 = pneg %p37
        %p215 = pneg %p61
        %p216 = pneg %p58
        %p217 = pneg %p82
        %p218 = pneg %p79
        %s219 = smul.u32 2, %s19
        %p220 = scmp.lt.s32.totalorder %s219, 7
        %s221 = scalar_select %p220, %s219, 7
        %s222 = smul.addr %s221, 8
        %s223 = scalar_lea.vmem %s3, %s222
        %p224 = pneg %p108
        %p225 = pneg %p105
        %p226 = pneg %p129
        %p227 = pneg %p126
        %p228 = pneg %p155
        %p229 = pneg %p152
        %s230 = sand.u32 %s142, 1
        %s231 = scalar_lea.sflag [#allocation3], %s230
        %s232 = sand.u32 %s142, 1
        %s233 = smul.addr %s232, 16
        %s234 = scalar_lea.vmem [#allocation2], %s233
        %s235 = smul.u32 2, %s19
        %p236 = scmp.lt.s32.totalorder %s235, 7
        %s237 = scalar_select %p236, %s235, 7
        %s238 = smul.addr %s237, 8
        %s239 = scalar_lea.vmem %s0, %s238
        %s240 = smul.u32 2, %s19
        %s241 = smul.u32 2, %s19
        %p242 = scmp.lt.s32.totalorder %s241, 7
        %s243 = scalar_select %p242, %s241, 7
        %s244 = smul.addr %s243, 8
        %s245 = scalar_lea.vmem %s3, %s244
        %s246 = smul.u32 2, %s19
        %s247 = smul.u32 2, %s19
        %v248 = vld [vmem:[%s239] sm:$0xff]
        %v249 = vld [vmem:[%s239 + $0x8] sm:$0xff]
        %v250 = vld [vmem:[%s245] sm:$0xff]
        %v251 = vld [vmem:[%s245 + $0x8] sm:$0xff]
        %v252 = vld [vmem:[%s4] sm:$0x1]
        %v253 = vld [vmem:[%s2] sm:$0xff]
        %v254 = vld [vmem:[%s2 + $0x8] sm:$0xff]
        %v255 = vld [vmem:[%s2 + $0x10] sm:$0xff]
        %v256 = vld [vmem:[%s2 + $0x18] sm:$0xff]
        %v257 = vld [vmem:[%s2 + $0x20] sm:$0xff]
        %v258 = vld [vmem:[%s2 + $0x28] sm:$0xff]
        %v259 = vld [vmem:[%s2 + $0x30] sm:$0xff]
        %v260 = vld [vmem:[%s2 + $0x38] sm:$0xff]
        %v261 = vld [vmem:[%s1] sm:$0x1]
        %v262 = vld [vmem:[%s1 + $0x1] sm:$0x1]
        %v263 = vld [vmem:[%s1 + $0x2] sm:$0x1]
        %265 = vset.pattern.permute.xlu0 0
        %266 = vperm.xlu0 %265, %v248
        %v267 = vpop.permute.xlu0 %266
        %270 = vset.pattern.permute.xlu0 0
        %271 = vperm.xlu0 %270, %v249
        %v272 = vpop.permute.xlu0 %271
        %v274 = vperm.slane %v261, 0
        %v275 = vsub.f32 %v267, %v274
        %v276 = vsub.f32 %v272, %v274
        %v277 = vmul.f32 %v275, %v275
        %v278 = vmul.f32 %v276, %v276
        %279 = vset.pattern.permute.xlu0 1
        %280 = vperm.xlu0 %279, %v248
        %v281 = vpop.permute.xlu0 %280
        %283 = vset.pattern.permute.xlu0 1
        %284 = vperm.xlu0 %283, %v249
        %v285 = vpop.permute.xlu0 %284
        %v287 = vperm.slane %v262, 0
        %v288 = vsub.f32 %v281, %v287
        %v289 = vsub.f32 %v285, %v287
        %v290 = vmul.f32 %v288, %v288
        %v291 = vmul.f32 %v289, %v289
        %v292 = vadd.f32 %v277, %v290
        %v293 = vadd.f32 %v278, %v291
        %294 = vset.pattern.permute.xlu0 2
        %295 = vperm.xlu0 %294, %v248
        %v296 = vpop.permute.xlu0 %295
        %298 = vset.pattern.permute.xlu0 2
        %299 = vperm.xlu0 %298, %v249
        %v300 = vpop.permute.xlu0 %299
        %v302 = vperm.slane %v263, 0
        %v303 = vsub.f32 %v296, %v302
        %v304 = vsub.f32 %v300, %v302
        %v305 = vmul.f32 %v303, %v303
        %v306 = vmul.f32 %v304, %v304
        %v307 = vadd.f32 %v292, %v305
        %v308 = vadd.f32 %v293, %v306
        %v309 = vlaneseq
        %v310 = vand.u32 %v309, 127
        %v311 = vlaneseq
        %v312 = vshrl.u32 %v311, 7
        %v313 = vadd.s32 %v312, 8
        %s314 = smul.u32 %s19, 16
        %v315 = vstv %s314
        %v316 = vadd.s32 %v312, %v315
        %v317 = vadd.s32 %v313, %v315
        %vm318 = vcmp.eq.s32.totalorder %v310, %v316
        %vm319 = vcmp.eq.s32.totalorder %v310, %v317
        %vm320 = vcmp.ge.s32.totalorder %v310, 60
        %vm321 = vmor %vm318, %vm320
        %vm322 = vmor %vm319, %vm320
        %v323 = vsel %vm321, 1e+30, %v307
        %v324 = vsel %vm322, 1e+30, %v308
        %vm325 = vcmask 523264
        %v326 = vsel %vm325, %v323, inf
        %327 = vmin.xlane.f32.xlu0 %v326
        %v328 = vpop.xlane.xlu0 %327
        %v329 = vsel %vm325, %v324, inf
        %330 = vmin.xlane.f32.xlu0 %v329
        %v331 = vpop.xlane.xlu0 %330
        %vm332 = vcmp.le.f32.partialorder %v323, %v328
        %vm333 = vcmp.le.f32.partialorder %v324, %v331
        %v334 = vsel %vm332, %v310, 64
        %v335 = vsel %vm333, %v310, 64
        %v336 = vsel %vm325, %v334, 2147483647
        %v337 = vand.u32 %v336, 65535
        %v338 = vshra.s32 %v336, 16
        %v339 = vcvt.s32.f32 %v337
        %v340 = vcvt.s32.f32 %v338
        %341 = vmin.xlane.f32.xlu0 %v340
        %v342 = vpop.xlane.xlu0 %341
        %vm343 = vcmp.eq.f32.partialorder %v340, %v342
        %v344 = vsel %vm343, %v339, inf
        %345 = vmin.xlane.f32.xlu0 %v344
        %v346 = vpop.xlane.xlu0 %345
        %v347 = vcvt.f32.s32 %v346
        %v348 = vcvt.f32.s32 %v342
        %v349 = vshll.u32 %v348, 16
        %v350 = vadd.s32 %v349, %v347
        %v351 = vsel %vm325, %v335, 2147483647
        %v352 = vand.u32 %v351, 65535
        %v353 = vshra.s32 %v351, 16
        %v354 = vcvt.s32.f32 %v352
        %v355 = vcvt.s32.f32 %v353
        %356 = vmin.xlane.f32.xlu0 %v355
        %v357 = vpop.xlane.xlu0 %356
        %vm358 = vcmp.eq.f32.partialorder %v355, %v357
        %v359 = vsel %vm358, %v354, inf
        %360 = vmin.xlane.f32.xlu0 %v359
        %v361 = vpop.xlane.xlu0 %360
        %v362 = vcvt.f32.s32 %v361
        %v363 = vcvt.f32.s32 %v357
        %v364 = vshll.u32 %v363, 16
        %v365 = vadd.s32 %v364, %v362
        %vm366 = vcmp.eq.s32.totalorder %v310, %v350
        %vm367 = vcmp.eq.s32.totalorder %v310, %v365
        %v368 = vsel %vm366, 1e+30, %v323
        %v369 = vsel %vm367, 1e+30, %v324
        %v370 = vsel %vm366, 1, 0
        %v371 = vsel %vm367, 1, 0
        %v372 = vcvt.s32.f32 %v370
        %v373 = vcvt.s32.f32 %v371
        %v375 = vsel %vm325, %v372, 0
        %v378 = vsel %vm325, %v373, 0
        %380 = vmatpush.msra.mxu0 0.0
        %381 = vmatpush.msra.mxu0 0.0
        %382 = vmatpush.msra.mxu0 0.0
        %383 = vmatpush.msra.mxu0 0.0
        %384 = vmatpush.msra.mxu0 0.0
        %385 = vmatpush.msra.mxu0 0.0
        %386 = vmatpush.msra.mxu0 0.0
        %387 = vmatpush.msra.mxu0 0.0
        %388 = vmatpush.msra.mxu0 %v260
        %389 = vmatpush.msra.mxu0 %v259
        %390 = vmatpush.msra.mxu0 %v258
        %391 = vmatpush.msra.mxu0 %v257
        %392 = vmatpush.msra.mxu0 %v256
        %393 = vmatpush.msra.mxu0 %v255
        %394 = vmatpush.msra.mxu0 %v254
        %395 = vmatpush.msra.mxu0 %v253
        %396 = vmatmul.f32.gmra.mxu0 %v375
        %v397 = vpop.f32.mrf.mxu0
        %v398 = vadd.f32 0.0, %v397
        %399 = vmatmul.f32.gmra.mxu0 %v378
        %v400 = vpop.f32.mrf.mxu0
        %v401 = vadd.f32 0.0, %v400
        %402 = vdwg.mxu0
        %v403 = vsel %vm325, %v368, inf
        %404 = vmin.xlane.f32.xlu0 %v403
        %v405 = vpop.xlane.xlu0 %404
        %v406 = vsel %vm325, %v369, inf
        %407 = vmin.xlane.f32.xlu0 %v406
        %v408 = vpop.xlane.xlu0 %407
        %vm409 = vcmp.le.f32.partialorder %v368, %v405
        %vm410 = vcmp.le.f32.partialorder %v369, %v408
        %v411 = vsel %vm409, %v310, 64
        %v412 = vsel %vm410, %v310, 64
        %v413 = vsel %vm325, %v411, 2147483647
        %v414 = vand.u32 %v413, 65535
        %v415 = vshra.s32 %v413, 16
        %v416 = vcvt.s32.f32 %v414
        %v417 = vcvt.s32.f32 %v415
        %418 = vmin.xlane.f32.xlu0 %v417
        %v419 = vpop.xlane.xlu0 %418
        %vm420 = vcmp.eq.f32.partialorder %v417, %v419
        %v421 = vsel %vm420, %v416, inf
        %422 = vmin.xlane.f32.xlu0 %v421
        %v423 = vpop.xlane.xlu0 %422
        %v424 = vcvt.f32.s32 %v423
        %v425 = vcvt.f32.s32 %v419
        %v426 = vshll.u32 %v425, 16
        %v427 = vadd.s32 %v426, %v424
        %v428 = vsel %vm325, %v412, 2147483647
        %v429 = vand.u32 %v428, 65535
        %v430 = vshra.s32 %v428, 16
        %v431 = vcvt.s32.f32 %v429
        %v432 = vcvt.s32.f32 %v430
        %433 = vmin.xlane.f32.xlu0 %v432
        %v434 = vpop.xlane.xlu0 %433
        %vm435 = vcmp.eq.f32.partialorder %v432, %v434
        %v436 = vsel %vm435, %v431, inf
        %437 = vmin.xlane.f32.xlu0 %v436
        %v438 = vpop.xlane.xlu0 %437
        %v439 = vcvt.f32.s32 %v438
        %v440 = vcvt.f32.s32 %v434
        %v441 = vshll.u32 %v440, 16
        %v442 = vadd.s32 %v441, %v439
        %vm443 = vcmp.eq.s32.totalorder %v310, %v427
        %vm444 = vcmp.eq.s32.totalorder %v310, %v442
        %v445 = vsel %vm443, 1e+30, %v368
        %v446 = vsel %vm444, 1e+30, %v369
        %v447 = vsel %vm443, 1, 0
        %v448 = vsel %vm444, 1, 0
        %v449 = vcvt.s32.f32 %v447
        %v450 = vcvt.s32.f32 %v448
        %v452 = vsel %vm325, %v449, 0
        %v455 = vsel %vm325, %v450, 0
        %457 = vmatpush.msra.mxu0 0.0
        %458 = vmatpush.msra.mxu0 0.0
        %459 = vmatpush.msra.mxu0 0.0
        %460 = vmatpush.msra.mxu0 0.0
        %461 = vmatpush.msra.mxu0 0.0
        %462 = vmatpush.msra.mxu0 0.0
        %463 = vmatpush.msra.mxu0 0.0
        %464 = vmatpush.msra.mxu0 0.0
        %465 = vmatpush.msra.mxu0 %v260
        %466 = vmatpush.msra.mxu0 %v259
        %467 = vmatpush.msra.mxu0 %v258
        %468 = vmatpush.msra.mxu0 %v257
        %469 = vmatpush.msra.mxu0 %v256
        %470 = vmatpush.msra.mxu0 %v255
        %471 = vmatpush.msra.mxu0 %v254
        %472 = vmatpush.msra.mxu0 %v253
        %473 = vmatmul.f32.gmra.mxu0 %v452
        %v474 = vpop.f32.mrf.mxu0
        %v475 = vadd.f32 0.0, %v474
        %476 = vmatmul.f32.gmra.mxu0 %v455
        %v477 = vpop.f32.mrf.mxu0
        %v478 = vadd.f32 0.0, %v477
        %479 = vdwg.mxu0
        %v480 = vsel %vm325, %v445, inf
        %481 = vmin.xlane.f32.xlu0 %v480
        %v482 = vpop.xlane.xlu0 %481
        %v483 = vsel %vm325, %v446, inf
        %484 = vmin.xlane.f32.xlu0 %v483
        %v485 = vpop.xlane.xlu0 %484
        %vm486 = vcmp.le.f32.partialorder %v445, %v482
        %vm487 = vcmp.le.f32.partialorder %v446, %v485
        %v488 = vsel %vm486, %v310, 64
        %v489 = vsel %vm487, %v310, 64
        %v490 = vsel %vm325, %v488, 2147483647
        %v491 = vand.u32 %v490, 65535
        %v492 = vshra.s32 %v490, 16
        %v493 = vcvt.s32.f32 %v491
        %v494 = vcvt.s32.f32 %v492
        %495 = vmin.xlane.f32.xlu0 %v494
        %v496 = vpop.xlane.xlu0 %495
        %vm497 = vcmp.eq.f32.partialorder %v494, %v496
        %v498 = vsel %vm497, %v493, inf
        %499 = vmin.xlane.f32.xlu0 %v498
        %v500 = vpop.xlane.xlu0 %499
        %v501 = vcvt.f32.s32 %v500
        %v502 = vcvt.f32.s32 %v496
        %v503 = vshll.u32 %v502, 16
        %v504 = vadd.s32 %v503, %v501
        %v505 = vsel %vm325, %v489, 2147483647
        %v506 = vand.u32 %v505, 65535
        %v507 = vshra.s32 %v505, 16
        %v508 = vcvt.s32.f32 %v506
        %v509 = vcvt.s32.f32 %v507
        %510 = vmin.xlane.f32.xlu0 %v509
        %v511 = vpop.xlane.xlu0 %510
        %vm512 = vcmp.eq.f32.partialorder %v509, %v511
        %v513 = vsel %vm512, %v508, inf
        %514 = vmin.xlane.f32.xlu0 %v513
        %v515 = vpop.xlane.xlu0 %514
        %v516 = vcvt.f32.s32 %v515
        %v517 = vcvt.f32.s32 %v511
        %v518 = vshll.u32 %v517, 16
        %v519 = vadd.s32 %v518, %v516
        %vm520 = vcmp.eq.s32.totalorder %v310, %v504
        %vm521 = vcmp.eq.s32.totalorder %v310, %v519
        %v522 = vsel %vm520, 1e+30, %v445
        %v523 = vsel %vm521, 1e+30, %v446
        %v524 = vsel %vm520, 1, 0
        %v525 = vsel %vm521, 1, 0
        %v526 = vcvt.s32.f32 %v524
        %v527 = vcvt.s32.f32 %v525
        %v529 = vsel %vm325, %v526, 0
        %v532 = vsel %vm325, %v527, 0
        %534 = vmatpush.msra.mxu0 0.0
        %535 = vmatpush.msra.mxu0 0.0
        %536 = vmatpush.msra.mxu0 0.0
        %537 = vmatpush.msra.mxu0 0.0
        %538 = vmatpush.msra.mxu0 0.0
        %539 = vmatpush.msra.mxu0 0.0
        %540 = vmatpush.msra.mxu0 0.0
        %541 = vmatpush.msra.mxu0 0.0
        %542 = vmatpush.msra.mxu0 %v260
        %543 = vmatpush.msra.mxu0 %v259
        %544 = vmatpush.msra.mxu0 %v258
        %545 = vmatpush.msra.mxu0 %v257
        %546 = vmatpush.msra.mxu0 %v256
        %547 = vmatpush.msra.mxu0 %v255
        %548 = vmatpush.msra.mxu0 %v254
        %549 = vmatpush.msra.mxu0 %v253
        %550 = vmatmul.f32.gmra.mxu0 %v529
        %v551 = vpop.f32.mrf.mxu0
        %v552 = vadd.f32 0.0, %v551
        %553 = vmatmul.f32.gmra.mxu0 %v532
        %v554 = vpop.f32.mrf.mxu0
        %v555 = vadd.f32 0.0, %v554
        %556 = vdwg.mxu0
        %v557 = vsel %vm325, %v522, inf
        %558 = vmin.xlane.f32.xlu0 %v557
        %v559 = vpop.xlane.xlu0 %558
        %v560 = vsel %vm325, %v523, inf
        %561 = vmin.xlane.f32.xlu0 %v560
        %v562 = vpop.xlane.xlu0 %561
        %vm563 = vcmp.le.f32.partialorder %v522, %v559
        %vm564 = vcmp.le.f32.partialorder %v523, %v562
        %v565 = vsel %vm563, %v310, 64
        %v566 = vsel %vm564, %v310, 64
        %v567 = vsel %vm325, %v565, 2147483647
        %v568 = vand.u32 %v567, 65535
        %v569 = vshra.s32 %v567, 16
        %v570 = vcvt.s32.f32 %v568
        %v571 = vcvt.s32.f32 %v569
        %572 = vmin.xlane.f32.xlu0 %v571
        %v573 = vpop.xlane.xlu0 %572
        %vm574 = vcmp.eq.f32.partialorder %v571, %v573
        %v575 = vsel %vm574, %v570, inf
        %576 = vmin.xlane.f32.xlu0 %v575
        %v577 = vpop.xlane.xlu0 %576
        %v578 = vcvt.f32.s32 %v577
        %v579 = vcvt.f32.s32 %v573
        %v580 = vshll.u32 %v579, 16
        %v581 = vadd.s32 %v580, %v578
        %v582 = vsel %vm325, %v566, 2147483647
        %v583 = vand.u32 %v582, 65535
        %v584 = vshra.s32 %v582, 16
        %v585 = vcvt.s32.f32 %v583
        %v586 = vcvt.s32.f32 %v584
        %587 = vmin.xlane.f32.xlu0 %v586
        %v588 = vpop.xlane.xlu0 %587
        %vm589 = vcmp.eq.f32.partialorder %v586, %v588
        %v590 = vsel %vm589, %v585, inf
        %591 = vmin.xlane.f32.xlu0 %v590
        %v592 = vpop.xlane.xlu0 %591
        %v593 = vcvt.f32.s32 %v592
        %v594 = vcvt.f32.s32 %v588
        %v595 = vshll.u32 %v594, 16
        %v596 = vadd.s32 %v595, %v593
        %vm597 = vcmp.eq.s32.totalorder %v310, %v581
        %vm598 = vcmp.eq.s32.totalorder %v310, %v596
        %v599 = vsel %vm597, 1, 0
        %v600 = vsel %vm598, 1, 0
        %v601 = vcvt.s32.f32 %v599
        %v602 = vcvt.s32.f32 %v600
        %v604 = vsel %vm325, %v601, 0
        %v607 = vsel %vm325, %v602, 0
        %609 = vmatpush.msra.mxu0 0.0
        %610 = vmatpush.msra.mxu0 0.0
        %611 = vmatpush.msra.mxu0 0.0
        %612 = vmatpush.msra.mxu0 0.0
        %613 = vmatpush.msra.mxu0 0.0
        %614 = vmatpush.msra.mxu0 0.0
        %615 = vmatpush.msra.mxu0 0.0
        %616 = vmatpush.msra.mxu0 0.0
        %617 = vmatpush.msra.mxu0 %v260
        %618 = vmatpush.msra.mxu0 %v259
        %619 = vmatpush.msra.mxu0 %v258
        %620 = vmatpush.msra.mxu0 %v257
        %621 = vmatpush.msra.mxu0 %v256
        %622 = vmatpush.msra.mxu0 %v255
        %623 = vmatpush.msra.mxu0 %v254
        %624 = vmatpush.msra.mxu0 %v253
        %625 = vmatmul.f32.gmra.mxu0 %v604
        %v626 = vpop.f32.mrf.mxu0
        %v627 = vadd.f32 0.0, %v626
        %628 = vmatmul.f32.gmra.mxu0 %v607
        %v629 = vpop.f32.mrf.mxu0
        %v630 = vadd.f32 0.0, %v629
        %631 = vdwg.mxu0
        %vm632 = vcmask 7168
        %v633 = vsel %vm632, %v350, %v427
        %v634 = vsel %vm632, %v365, %v442
        %vm635 = vcmask 15360
        %v636 = vsel %vm635, %v633, %v504
        %v637 = vsel %vm635, %v634, %v519
        %vm638 = vcmask 23552
        %v639 = vsel %vm638, %v636, %v581
        %v640 = vsel %vm638, %v637, %v596
        %643 = vrot.lane.b32.xlu0 %v475, 1
        %v644 = vpop.permute.xlu0 %643
        %645 = vrot.lane.b32.xlu0 %v478, 1
        %v646 = vpop.permute.xlu0 %645
        %651 = vrot.lane.b32.xlu0 %v552, 2
        %v652 = vpop.permute.xlu0 %651
        %653 = vrot.lane.b32.xlu0 %v555, 2
        %v654 = vpop.permute.xlu0 %653
        %659 = vrot.lane.b32.xlu0 %v627, 3
        %v660 = vpop.permute.xlu0 %659
        %661 = vrot.lane.b32.xlu0 %v630, 3
        %v662 = vpop.permute.xlu0 %661
        %v665 = vsel %vm632, %v398, %v644
        %v666 = vsel %vm632, %v401, %v646
        %v667 = vsel %vm635, %v665, %v652
        %v668 = vsel %vm635, %v666, %v654
        %v669 = vsel %vm638, %v667, %v660
        %v670 = vsel %vm638, %v668, %v662
        %673 = vrot.lane.b32.xlu0 %v398, 127
        %v674 = vpop.permute.xlu0 %673
        %675 = vrot.lane.b32.xlu0 %v401, 127
        %v676 = vpop.permute.xlu0 %675
        %679 = vrot.lane.b32.xlu0 %v552, 1
        %v680 = vpop.permute.xlu0 %679
        %681 = vrot.lane.b32.xlu0 %v555, 1
        %v682 = vpop.permute.xlu0 %681
        %685 = vrot.lane.b32.xlu0 %v627, 2
        %v686 = vpop.permute.xlu0 %685
        %687 = vrot.lane.b32.xlu0 %v630, 2
        %v688 = vpop.permute.xlu0 %687
        %v691 = vsel %vm632, %v674, %v475
        %v692 = vsel %vm632, %v676, %v478
        %v693 = vsel %vm635, %v691, %v680
        %v694 = vsel %vm635, %v692, %v682
        %v695 = vsel %vm638, %v693, %v686
        %v696 = vsel %vm638, %v694, %v688
        %697 = vrot.lane.b32.xlu0 %v398, 126
        %v698 = vpop.permute.xlu0 %697
        %699 = vrot.lane.b32.xlu0 %v401, 126
        %v700 = vpop.permute.xlu0 %699
        %703 = vrot.lane.b32.xlu0 %v475, 127
        %v704 = vpop.permute.xlu0 %703
        %705 = vrot.lane.b32.xlu0 %v478, 127
        %v706 = vpop.permute.xlu0 %705
        %709 = vrot.lane.b32.xlu0 %v627, 1
        %v710 = vpop.permute.xlu0 %709
        %711 = vrot.lane.b32.xlu0 %v630, 1
        %v712 = vpop.permute.xlu0 %711
        %v715 = vsel %vm632, %v698, %v704
        %v716 = vsel %vm632, %v700, %v706
        %v717 = vsel %vm635, %v715, %v552
        %v718 = vsel %vm635, %v716, %v555
        %v719 = vsel %vm638, %v717, %v710
        %v720 = vsel %vm638, %v718, %v712
        %v721 = vsub.f32 %v669, %v267
        %v722 = vsub.f32 %v670, %v272
        %v723 = vsub.f32 %v695, %v281
        %v724 = vsub.f32 %v696, %v285
        %v725 = vsub.f32 %v719, %v296
        %v726 = vsub.f32 %v720, %v300
        %728 = vset.pattern.permute.xlu0 0
        %729 = vperm.xlu0 %728, %v250
        %v730 = vpop.permute.xlu0 %729
        %733 = vset.pattern.permute.xlu0 0
        %734 = vperm.xlu0 %733, %v251
        %v735 = vpop.permute.xlu0 %734
        %v737 = vmul.f32 %v730, %v721
        %v738 = vmul.f32 %v735, %v722
        %739 = vset.pattern.permute.xlu0 3
        %740 = vperm.xlu0 %739, %v250
        %v741 = vpop.permute.xlu0 %740
        %743 = vset.pattern.permute.xlu0 3
        %744 = vperm.xlu0 %743, %v251
        %v745 = vpop.permute.xlu0 %744
        %v747 = vmul.f32 %v741, %v723
        %v748 = vmul.f32 %v745, %v724
        %v749 = vadd.f32 %v737, %v747
        %v750 = vadd.f32 %v738, %v748
        %751 = vset.pattern.permute.xlu0 6
        %752 = vperm.xlu0 %751, %v250
        %v753 = vpop.permute.xlu0 %752
        %755 = vset.pattern.permute.xlu0 6
        %756 = vperm.xlu0 %755, %v251
        %v757 = vpop.permute.xlu0 %756
        %v759 = vmul.f32 %v753, %v725
        %v760 = vmul.f32 %v757, %v726
        %v761 = vadd.f32 %v749, %v759
        %v762 = vadd.f32 %v750, %v760
        %763 = vset.pattern.permute.xlu0 1
        %764 = vperm.xlu0 %763, %v250
        %v765 = vpop.permute.xlu0 %764
        %767 = vset.pattern.permute.xlu0 1
        %768 = vperm.xlu0 %767, %v251
        %v769 = vpop.permute.xlu0 %768
        %v771 = vmul.f32 %v765, %v721
        %v772 = vmul.f32 %v769, %v722
        %773 = vset.pattern.permute.xlu0 4
        %774 = vperm.xlu0 %773, %v250
        %v775 = vpop.permute.xlu0 %774
        %777 = vset.pattern.permute.xlu0 4
        %778 = vperm.xlu0 %777, %v251
        %v779 = vpop.permute.xlu0 %778
        %v781 = vmul.f32 %v775, %v723
        %v782 = vmul.f32 %v779, %v724
        %v783 = vadd.f32 %v771, %v781
        %v784 = vadd.f32 %v772, %v782
        %785 = vset.pattern.permute.xlu0 7
        %786 = vperm.xlu0 %785, %v250
        %v787 = vpop.permute.xlu0 %786
        %789 = vset.pattern.permute.xlu0 7
        %790 = vperm.xlu0 %789, %v251
        %v791 = vpop.permute.xlu0 %790
        %v793 = vmul.f32 %v787, %v725
        %v794 = vmul.f32 %v791, %v726
        %v795 = vadd.f32 %v783, %v793
        %v796 = vadd.f32 %v784, %v794
        %797 = vset.pattern.permute.xlu0 2
        %798 = vperm.xlu0 %797, %v250
        %v799 = vpop.permute.xlu0 %798
        %801 = vset.pattern.permute.xlu0 2
        %802 = vperm.xlu0 %801, %v251
        %v803 = vpop.permute.xlu0 %802
        %v805 = vmul.f32 %v799, %v721
        %v806 = vmul.f32 %v803, %v722
        %807 = vset.pattern.permute.xlu0 5
        %808 = vperm.xlu0 %807, %v250
        %v809 = vpop.permute.xlu0 %808
        %811 = vset.pattern.permute.xlu0 5
        %812 = vperm.xlu0 %811, %v251
        %v813 = vpop.permute.xlu0 %812
        %v815 = vmul.f32 %v809, %v723
        %v816 = vmul.f32 %v813, %v724
        %v817 = vadd.f32 %v805, %v815
        %v818 = vadd.f32 %v806, %v816
        %819 = vset.pattern.permute.xlu0 8
        %820 = vperm.xlu0 %819, %v250
        %v821 = vpop.permute.xlu0 %820
        %823 = vset.pattern.permute.xlu0 8
        %824 = vperm.xlu0 %823, %v251
        %v825 = vpop.permute.xlu0 %824
        %v827 = vmul.f32 %v821, %v725
        %v828 = vmul.f32 %v825, %v726
        %v829 = vadd.f32 %v817, %v827
        %v830 = vadd.f32 %v818, %v828
        %v831 = vmul.f32 %v761, %v761
        %v832 = vmul.f32 %v762, %v762
        %v833 = vmul.f32 %v795, %v795
        %v834 = vmul.f32 %v796, %v796
        %v835 = vadd.f32 %v831, %v833
        %v836 = vadd.f32 %v832, %v834
        %v837 = vmul.f32 %v829, %v829
        %v838 = vmul.f32 %v830, %v830
        %v839 = vadd.f32 %v835, %v837
        %v840 = vadd.f32 %v836, %v838
        %v841 = vrsqrt.pop %v839
        %v842 = vmul.f32 %v841, %v839
        %v843 = vmul.f32 %v842, %v841
        %v844 = vmul.f32 0.5, %v843
        %v845 = vsub.f32 1.5, %v844
        %v846 = vmul.f32 %v841, %v845
        %v847 = vmul.f32 %v839, %v846
        %vm848 = vcmp.eq.f32.partialorder %v839, inf
        %v849 = vsel %vm848, %v839, %v847
        %vm850 = vcmp.eq.f32.partialorder %v839, 0.0
        %v851 = vand.u32 %v839, 2147483648
        %v852 = vsel %vm850, %v851, %v849
        %v853 = vrsqrt.pop %v840
        %v854 = vmul.f32 %v853, %v840
        %v855 = vmul.f32 %v854, %v853
        %v856 = vmul.f32 0.5, %v855
        %v857 = vsub.f32 1.5, %v856
        %v858 = vmul.f32 %v853, %v857
        %v859 = vmul.f32 %v840, %v858
        %vm860 = vcmp.eq.f32.partialorder %v840, inf
        %v861 = vsel %vm860, %v840, %v859
        %vm862 = vcmp.eq.f32.partialorder %v840, 0.0
        %v863 = vand.u32 %v840, 2147483648
        %v864 = vsel %vm862, %v863, %v861
        %v866 = vperm.slane %v252, 0
        %v868 = vmul.f32 %v267, %v866
        %v869 = vmul.f32 %v272, %v866
        %v870 = vmul.f32 %v281, %v866
        %v871 = vmul.f32 %v285, %v866
        %v872 = vmul.f32 %v296, %v866
        %v873 = vmul.f32 %v300, %v866
        %876 = vrot.lane.b32.xlu0 %v870, 8
        %v877 = vpop.permute.xlu0 %876
        %878 = vrot.lane.b32.xlu0 %v871, 8
        %v879 = vpop.permute.xlu0 %878
        %884 = vrot.lane.b32.xlu0 %v872, 16
        %v885 = vpop.permute.xlu0 %884
        %886 = vrot.lane.b32.xlu0 %v873, 16
        %v887 = vpop.permute.xlu0 %886
        %vm890 = vcmask 64512
        %v891 = vsel %vm890, %v868, %v877
        %v892 = vsel %vm890, %v869, %v879
        %vm893 = vcmask 130048
        %v894 = vsel %vm893, %v891, %v885
        %v895 = vsel %vm893, %v892, %v887
        %897 = vset.pattern.permute.xlu0 0
        %898 = vperm.xlu0 %897, %v852
        %v899 = vpop.permute.xlu0 %898
        %902 = vset.pattern.permute.xlu0 0
        %903 = vperm.xlu0 %902, %v864
        %v904 = vpop.permute.xlu0 %903
        %v906 = vmul.f32 %v899, %v866
        %v907 = vmul.f32 %v904, %v866
        %908 = vset.pattern.permute.xlu0 1
        %909 = vperm.xlu0 %908, %v852
        %v910 = vpop.permute.xlu0 %909
        %912 = vset.pattern.permute.xlu0 1
        %913 = vperm.xlu0 %912, %v864
        %v914 = vpop.permute.xlu0 %913
        %v916 = vmul.f32 %v910, %v866
        %v917 = vmul.f32 %v914, %v866
        %918 = vset.pattern.permute.xlu0 2
        %919 = vperm.xlu0 %918, %v852
        %v920 = vpop.permute.xlu0 %919
        %922 = vset.pattern.permute.xlu0 2
        %923 = vperm.xlu0 %922, %v864
        %v924 = vpop.permute.xlu0 %923
        %v926 = vmul.f32 %v920, %v866
        %v927 = vmul.f32 %v924, %v866
        %928 = vset.pattern.permute.xlu0 3
        %929 = vperm.xlu0 %928, %v852
        %v930 = vpop.permute.xlu0 %929
        %932 = vset.pattern.permute.xlu0 3
        %933 = vperm.xlu0 %932, %v864
        %v934 = vpop.permute.xlu0 %933
        %v936 = vmul.f32 %v930, %v866
        %v937 = vmul.f32 %v934, %v866
        %940 = vrot.lane.b32.xlu0 %v916, 8
        %v941 = vpop.permute.xlu0 %940
        %942 = vrot.lane.b32.xlu0 %v917, 8
        %v943 = vpop.permute.xlu0 %942
        %948 = vrot.lane.b32.xlu0 %v926, 16
        %v949 = vpop.permute.xlu0 %948
        %950 = vrot.lane.b32.xlu0 %v927, 16
        %v951 = vpop.permute.xlu0 %950
        %956 = vrot.lane.b32.xlu0 %v936, 24
        %v957 = vpop.permute.xlu0 %956
        %958 = vrot.lane.b32.xlu0 %v937, 24
        %v959 = vpop.permute.xlu0 %958
        %v962 = vsel %vm890, %v906, %v941
        %v963 = vsel %vm890, %v907, %v943
        %v964 = vsel %vm893, %v962, %v949
        %v965 = vsel %vm893, %v963, %v951
        %vm966 = vcmask 195584
        %v967 = vsel %vm966, %v964, %v957
        %v968 = vsel %vm966, %v965, %v959
        %v969 = vand.u32 2147483647, %v894
        %vm970 = vcmp.le.f32.partialorder %v969, 0.7853982
        %vm971 = vcmp.lt.s32.totalorder %v894, 0
        %v972 = vand.u32 %v894, 2139095040
        %v973 = vshrl.u32 %v972, 23
        %v974 = vsub.s32 %v973, 127
        %v975 = vand.u32 2147483647, %v894
        %v976 = vand.u32 %v975, 8388607
        %v977 = vor.u32 %v976, 8388608
        %v978 = vsub.s32 0, %v977
        %v979 = vadd.s32 %v974, 1
        %vm980 = vcmp.gt.s32.totalorder %v979, 0
        %v981 = vsel %vm980, %v979, 0
        %v982 = vshrl.u32 %v981, 5
        %v983 = vand.u32 %v981, 31
        %v984 = vsub.s32 32, %v983
        %v985 = vshrl.u32 683565275, %v984
        %v986 = vshll.u32 683565275, %v983
        %v987 = vshrl.u32 2475754826, %v984
        %v988 = vor.u32 %v986, %v987
        %v989 = vshll.u32 2475754826, %v983
        %v990 = vshrl.u32 2131351028, %v984
        %v991 = vor.u32 %v989, %v990
        %v992 = vshll.u32 2131351028, %v983
        %v993 = vshrl.u32 2102212464, %v984
        %v994 = vor.u32 %v992, %v993
        %v995 = vshll.u32 2102212464, %v983
        %v996 = vshrl.u32 920167782, %v984
        %v997 = vor.u32 %v995, %v996
        %v998 = vshll.u32 920167782, %v983
        %v999 = vshrl.u32 1326507024, %v984
        %v1000 = vor.u32 %v998, %v999
        %vm1001 = vcmp.lt.s32.totalorder %v982, 1
        %vm1002 = vcmp.lt.s32.totalorder %v982, 2
        %vm1003 = vcmp.lt.s32.totalorder %v982, 3
        %vm1004 = vcmp.lt.s32.totalorder %v982, 4
        %v1005 = vsel %vm1001, %v985, %v988
        %v1006 = vsel %vm1004, %v994, 2102212464
        %v1007 = vsel %vm1003, %v991, %v1006
        %v1008 = vsel %vm1002, %v1005, %v1007
        %v1009 = vsel %vm1001, %v988, %v991
        %v1010 = vsel %vm1004, %v997, 920167782
        %v1011 = vsel %vm1003, %v994, %v1010
        %v1012 = vsel %vm1002, %v1009, %v1011
        %v1013 = vsel %vm1001, %v991, %v994
        %v1014 = vsel %vm1004, %v1000, 1326507024
        %v1015 = vsel %vm1003, %v997, %v1014
        %v1016 = vsel %vm1002, %v1013, %v1015
        %v1017 = vshll.u32 %v977, 8
        %v1018 = vand.u32 %v1017, 65535
        %v1019 = vshrl.u32 %v1017, 16
        %v1020 = vand.u32 %v1016, 65535
        %v1021 = vshrl.u32 %v1016, 16
        %v1022 = vmul.u32 %v1018, %v1020
        %v1023 = vmul.u32 %v1018, %v1021
        %v1024 = vmul.u32 %v1019, %v1020
        %v1025 = vmul.u32 %v1019, %v1021
        %v1026 = vshll.u32 %v1023, 16
        %v1027 = vshrl.u32 %v1023, 16
        %v1028 = vshll.u32 %v1024, 16
        %v1029 = vshrl.u32 %v1024, 16
        %vm1030 = vc.u32 %v1022, %v1026
        %v1031 = vsel %vm1030, 1, 0
        %v1032 = vadd.s32 %v1022, %v1026
        %v1033 = vadd.s32 %v1025, %v1031
        %vm1034 = vc.u32 %v1032, %v1028
        %v1035 = vsel %vm1034, 1, 0
        %v1036 = vadd.s32 %v1032, %v1028
        %v1037 = vadd.s32 %v1033, %v1035
        %v1038 = vadd.s32 %v1037, %v1027
        %v1039 = vadd.s32 %v1038, %v1029
        %v1040 = vand.u32 %v1017, 65535
        %v1041 = vshrl.u32 %v1017, 16
        %v1042 = vand.u32 %v1012, 65535
        %v1043 = vshrl.u32 %v1012, 16
        %v1044 = vmul.u32 %v1040, %v1042
        %v1045 = vmul.u32 %v1040, %v1043
        %v1046 = vmul.u32 %v1041, %v1042
        %v1047 = vmul.u32 %v1041, %v1043
        %v1048 = vshll.u32 %v1045, 16
        %v1049 = vshrl.u32 %v1045, 16
        %v1050 = vshll.u32 %v1046, 16
        %v1051 = vshrl.u32 %v1046, 16
        %vm1052 = vc.u32 %v1044, %v1048
        %v1053 = vsel %vm1052, 1, 0
        %v1054 = vadd.s32 %v1044, %v1048
        %v1055 = vadd.s32 %v1047, %v1053
        %vm1056 = vc.u32 %v1054, %v1050
        %v1057 = vsel %vm1056, 1, 0
        %v1058 = vadd.s32 %v1054, %v1050
        %v1059 = vadd.s32 %v1055, %v1057
        %v1060 = vadd.s32 %v1059, %v1049
        %v1061 = vadd.s32 %v1060, %v1051
        %v1062 = vmul.u32 %v1017, %v1008
        %v1063 = vadd.s32 %v1039, %v1058
        %vm1064 = vc.u32 %v1039, %v1058
        %v1065 = vadd.s32 %v1061, 1
        %v1066 = vsel %vm1064, %v1065, %v1061
        %v1067 = vadd.s32 %v1062, %v1066
        %v1068 = vadd.s32 %v1067, 536870912
        %v1069 = vshrl.u32 %v1068, 30
        %v1070 = vshll.u32 %v1069, 30
        %v1071 = vsub.s32 %v1067, %v1070
        %vm1072 = vcmp.lt.s32.totalorder %v1071, 0
        %v1073 = vsub.s32 0, %v1071
        %v1074 = vsel %vm1072, %v1073, %v1071
        %v1075 = vclz %v1074
        %v1076 = vsub.s32 %v1075, 2
        %vm1077 = vcmp.gt.s32.totalorder 0, %v1076
        %v1078 = vsel %vm1077, 0, %v1076
        %v1079 = vsub.s32 32, %v1078
        %v1080 = vshll.u32 %v1071, %v1078
        %v1081 = vshrl.u32 %v1063, %v1079
        %v1082 = vor.u32 %v1080, %v1081
        %v1083 = vsub.s32 4294967266, %v1078
        %v1084 = vadd.s32 %v1083, 127
        %v1085 = vshll.u32 %v1084, 23
        %v1086 = vor.u32 4788187, %v1085
        %v1087 = vand.u32 2147483647, %v1086
        %v1089 = vcvt.s32.f32 %v1082
        %v1090 = vmul.f32 %v1089, %v1087
        %v1091 = vxor.u32 %v1090, 2147483648
        %v1092 = vsel %vm971, %v1091, %v1090
        %v1093 = vsub.s32 4, %v1069
        %v1094 = vsel %vm971, %v1093, %v1069
        %v1095 = vsel %vm970, %v894, %v1092
        %v1096 = vsel %vm970, 0, %v1094
        %v1097 = vmul.f32 %v1095, %v1095
        %v1098 = vmul.f32 %v1097, -0.001358992
        %v1099 = vadd.f32 %v1098, 0.041655596
        %v1100 = vmul.f32 %v1097, %v1099
        %v1101 = vadd.f32 %v1100, -0.4999988
        %v1102 = vmul.f32 %v1097, %v1101
        %v1103 = vadd.f32 1.0, %v1102
        %v1104 = vmul.f32 %v1095, %v1095
        %v1105 = vmul.f32 %v1104, -0.00019511016
        %v1106 = vadd.f32 %v1105, 0.008332121
        %v1107 = vmul.f32 %v1104, %v1106
        %v1108 = vadd.f32 %v1107, -0.16666654
        %v1109 = vmul.f32 %v1104, %v1108
        %v1110 = vadd.f32 %v1109, 1.0
        %v1111 = vmul.f32 %v1110, %v1095
        %vm1112 = vweird.f32 %v894
        %v1113 = vadd.s32 %v1096, 3
        %v1114 = vand.u32 %v1113, 3
        %vm1115 = vcmp.lt.s32.totalorder %v1114, 2
        %vm1116 = vcmp.eq.s32.totalorder %v1114, 0
        %v1117 = vxor.u32 %v1111, 2147483648
        %v1118 = vsel %vm1116, %v1103, %v1117
        %vm1119 = vcmp.eq.s32.totalorder %v1114, 2
        %v1120 = vxor.u32 %v1103, 2147483648
        %v1121 = vsel %vm1119, %v1120, %v1111
        %v1122 = vsel %vm1115, %v1118, %v1121
        %v1123 = vsel %vm1112, nan, %v1122
        %v1124 = vand.u32 2147483647, %v895
        %vm1125 = vcmp.le.f32.partialorder %v1124, 0.7853982
        %vm1126 = vcmp.lt.s32.totalorder %v895, 0
        %v1127 = vand.u32 %v895, 2139095040
        %v1128 = vshrl.u32 %v1127, 23
        %v1129 = vsub.s32 %v1128, 127
        %v1130 = vand.u32 2147483647, %v895
        %v1131 = vand.u32 %v1130, 8388607
        %v1132 = vor.u32 %v1131, 8388608
        %v1133 = vsub.s32 0, %v1132
        %v1134 = vadd.s32 %v1129, 1
        %vm1135 = vcmp.gt.s32.totalorder %v1134, 0
        %v1136 = vsel %vm1135, %v1134, 0
        %v1137 = vshrl.u32 %v1136, 5
        %v1138 = vand.u32 %v1136, 31
        %v1139 = vsub.s32 32, %v1138
        %v1140 = vshrl.u32 683565275, %v1139
        %v1141 = vshll.u32 683565275, %v1138
        %v1142 = vshrl.u32 2475754826, %v1139
        %v1143 = vor.u32 %v1141, %v1142
        %v1144 = vshll.u32 2475754826, %v1138
        %v1145 = vshrl.u32 2131351028, %v1139
        %v1146 = vor.u32 %v1144, %v1145
        %v1147 = vshll.u32 2131351028, %v1138
        %v1148 = vshrl.u32 2102212464, %v1139
        %v1149 = vor.u32 %v1147, %v1148
        %v1150 = vshll.u32 2102212464, %v1138
        %v1151 = vshrl.u32 920167782, %v1139
        %v1152 = vor.u32 %v1150, %v1151
        %v1153 = vshll.u32 920167782, %v1138
        %v1154 = vshrl.u32 1326507024, %v1139
        %v1155 = vor.u32 %v1153, %v1154
        %vm1156 = vcmp.lt.s32.totalorder %v1137, 1
        %vm1157 = vcmp.lt.s32.totalorder %v1137, 2
        %vm1158 = vcmp.lt.s32.totalorder %v1137, 3
        %vm1159 = vcmp.lt.s32.totalorder %v1137, 4
        %v1160 = vsel %vm1156, %v1140, %v1143
        %v1161 = vsel %vm1159, %v1149, 2102212464
        %v1162 = vsel %vm1158, %v1146, %v1161
        %v1163 = vsel %vm1157, %v1160, %v1162
        %v1164 = vsel %vm1156, %v1143, %v1146
        %v1165 = vsel %vm1159, %v1152, 920167782
        %v1166 = vsel %vm1158, %v1149, %v1165
        %v1167 = vsel %vm1157, %v1164, %v1166
        %v1168 = vsel %vm1156, %v1146, %v1149
        %v1169 = vsel %vm1159, %v1155, 1326507024
        %v1170 = vsel %vm1158, %v1152, %v1169
        %v1171 = vsel %vm1157, %v1168, %v1170
        %v1172 = vshll.u32 %v1132, 8
        %v1173 = vand.u32 %v1172, 65535
        %v1174 = vshrl.u32 %v1172, 16
        %v1175 = vand.u32 %v1171, 65535
        %v1176 = vshrl.u32 %v1171, 16
        %v1177 = vmul.u32 %v1173, %v1175
        %v1178 = vmul.u32 %v1173, %v1176
        %v1179 = vmul.u32 %v1174, %v1175
        %v1180 = vmul.u32 %v1174, %v1176
        %v1181 = vshll.u32 %v1178, 16
        %v1182 = vshrl.u32 %v1178, 16
        %v1183 = vshll.u32 %v1179, 16
        %v1184 = vshrl.u32 %v1179, 16
        %vm1185 = vc.u32 %v1177, %v1181
        %v1186 = vsel %vm1185, 1, 0
        %v1187 = vadd.s32 %v1177, %v1181
        %v1188 = vadd.s32 %v1180, %v1186
        %vm1189 = vc.u32 %v1187, %v1183
        %v1190 = vsel %vm1189, 1, 0
        %v1191 = vadd.s32 %v1187, %v1183
        %v1192 = vadd.s32 %v1188, %v1190
        %v1193 = vadd.s32 %v1192, %v1182
        %v1194 = vadd.s32 %v1193, %v1184
        %v1195 = vand.u32 %v1172, 65535
        %v1196 = vshrl.u32 %v1172, 16
        %v1197 = vand.u32 %v1167, 65535
        %v1198 = vshrl.u32 %v1167, 16
        %v1199 = vmul.u32 %v1195, %v1197
        %v1200 = vmul.u32 %v1195, %v1198
        %v1201 = vmul.u32 %v1196, %v1197
        %v1202 = vmul.u32 %v1196, %v1198
        %v1203 = vshll.u32 %v1200, 16
        %v1204 = vshrl.u32 %v1200, 16
        %v1205 = vshll.u32 %v1201, 16
        %v1206 = vshrl.u32 %v1201, 16
        %vm1207 = vc.u32 %v1199, %v1203
        %v1208 = vsel %vm1207, 1, 0
        %v1209 = vadd.s32 %v1199, %v1203
        %v1210 = vadd.s32 %v1202, %v1208
        %vm1211 = vc.u32 %v1209, %v1205
        %v1212 = vsel %vm1211, 1, 0
        %v1213 = vadd.s32 %v1209, %v1205
        %v1214 = vadd.s32 %v1210, %v1212
        %v1215 = vadd.s32 %v1214, %v1204
        %v1216 = vadd.s32 %v1215, %v1206
        %v1217 = vmul.u32 %v1172, %v1163
        %v1218 = vadd.s32 %v1194, %v1213
        %vm1219 = vc.u32 %v1194, %v1213
        %v1220 = vadd.s32 %v1216, 1
        %v1221 = vsel %vm1219, %v1220, %v1216
        %v1222 = vadd.s32 %v1217, %v1221
        %v1223 = vadd.s32 %v1222, 536870912
        %v1224 = vshrl.u32 %v1223, 30
        %v1225 = vshll.u32 %v1224, 30
        %v1226 = vsub.s32 %v1222, %v1225
        %vm1227 = vcmp.lt.s32.totalorder %v1226, 0
        %v1228 = vsub.s32 0, %v1226
        %v1229 = vsel %vm1227, %v1228, %v1226
        %v1230 = vclz %v1229
        %v1231 = vsub.s32 %v1230, 2
        %vm1232 = vcmp.gt.s32.totalorder 0, %v1231
        %v1233 = vsel %vm1232, 0, %v1231
        %v1234 = vsub.s32 32, %v1233
        %v1235 = vshll.u32 %v1226, %v1233
        %v1236 = vshrl.u32 %v1218, %v1234
        %v1237 = vor.u32 %v1235, %v1236
        %v1238 = vsub.s32 4294967266, %v1233
        %v1239 = vadd.s32 %v1238, 127
        %v1240 = vshll.u32 %v1239, 23
        %v1241 = vor.u32 4788187, %v1240
        %v1242 = vand.u32 2147483647, %v1241
        %v1244 = vcvt.s32.f32 %v1237
        %v1245 = vmul.f32 %v1244, %v1242
        %v1246 = vxor.u32 %v1245, 2147483648
        %v1247 = vsel %vm1126, %v1246, %v1245
        %v1248 = vsub.s32 4, %v1224
        %v1249 = vsel %vm1126, %v1248, %v1224
        %v1250 = vsel %vm1125, %v895, %v1247
        %v1251 = vsel %vm1125, 0, %v1249
        %v1252 = vmul.f32 %v1250, %v1250
        %v1253 = vmul.f32 %v1252, -0.001358992
        %v1254 = vadd.f32 %v1253, 0.041655596
        %v1255 = vmul.f32 %v1252, %v1254
        %v1256 = vadd.f32 %v1255, -0.4999988
        %v1257 = vmul.f32 %v1252, %v1256
        %v1258 = vadd.f32 1.0, %v1257
        %v1259 = vmul.f32 %v1250, %v1250
        %v1260 = vmul.f32 %v1259, -0.00019511016
        %v1261 = vadd.f32 %v1260, 0.008332121
        %v1262 = vmul.f32 %v1259, %v1261
        %v1263 = vadd.f32 %v1262, -0.16666654
        %v1264 = vmul.f32 %v1259, %v1263
        %v1265 = vadd.f32 %v1264, 1.0
        %v1266 = vmul.f32 %v1265, %v1250
        %vm1267 = vweird.f32 %v895
        %v1268 = vadd.s32 %v1251, 3
        %v1269 = vand.u32 %v1268, 3
        %vm1270 = vcmp.lt.s32.totalorder %v1269, 2
        %vm1271 = vcmp.eq.s32.totalorder %v1269, 0
        %v1272 = vxor.u32 %v1266, 2147483648
        %v1273 = vsel %vm1271, %v1258, %v1272
        %vm1274 = vcmp.eq.s32.totalorder %v1269, 2
        %v1275 = vxor.u32 %v1258, 2147483648
        %v1276 = vsel %vm1274, %v1275, %v1266
        %v1277 = vsel %vm1270, %v1273, %v1276
        %v1278 = vsel %vm1267, nan, %v1277
        %1279 = vst.msk [vmem:[%s234] sm:$0xff] %vm966, %v1123
        %1280 = vst.msk [vmem:[%s234 + $0x8] sm:$0xff] %vm966, %v1278
        %v1281 = vand.u32 2147483647, %v894
        %vm1282 = vcmp.le.f32.partialorder %v1281, 0.7853982
        %vm1283 = vcmp.lt.s32.totalorder %v894, 0
        %v1284 = vand.u32 %v894, 2139095040
        %v1285 = vshrl.u32 %v1284, 23
        %v1286 = vsub.s32 %v1285, 127
        %v1287 = vand.u32 2147483647, %v894
        %v1288 = vand.u32 %v1287, 8388607
        %v1289 = vor.u32 %v1288, 8388608
        %v1290 = vsub.s32 0, %v1289
        %v1291 = vadd.s32 %v1286, 1
        %vm1292 = vcmp.gt.s32.totalorder %v1291, 0
        %v1293 = vsel %vm1292, %v1291, 0
        %v1294 = vshrl.u32 %v1293, 5
        %v1295 = vand.u32 %v1293, 31
        %v1296 = vsub.s32 32, %v1295
        %v1297 = vshrl.u32 683565275, %v1296
        %v1298 = vshll.u32 683565275, %v1295
        %v1299 = vshrl.u32 2475754826, %v1296
        %v1300 = vor.u32 %v1298, %v1299
        %v1301 = vshll.u32 2475754826, %v1295
        %v1302 = vshrl.u32 2131351028, %v1296
        %v1303 = vor.u32 %v1301, %v1302
        %v1304 = vshll.u32 2131351028, %v1295
        %v1305 = vshrl.u32 2102212464, %v1296
        %v1306 = vor.u32 %v1304, %v1305
        %v1307 = vshll.u32 2102212464, %v1295
        %v1308 = vshrl.u32 920167782, %v1296
        %v1309 = vor.u32 %v1307, %v1308
        %v1310 = vshll.u32 920167782, %v1295
        %v1311 = vshrl.u32 1326507024, %v1296
        %v1312 = vor.u32 %v1310, %v1311
        %vm1313 = vcmp.lt.s32.totalorder %v1294, 1
        %vm1314 = vcmp.lt.s32.totalorder %v1294, 2
        %vm1315 = vcmp.lt.s32.totalorder %v1294, 3
        %vm1316 = vcmp.lt.s32.totalorder %v1294, 4
        %v1317 = vsel %vm1313, %v1297, %v1300
        %v1318 = vsel %vm1316, %v1306, 2102212464
        %v1319 = vsel %vm1315, %v1303, %v1318
        %v1320 = vsel %vm1314, %v1317, %v1319
        %v1321 = vsel %vm1313, %v1300, %v1303
        %v1322 = vsel %vm1316, %v1309, 920167782
        %v1323 = vsel %vm1315, %v1306, %v1322
        %v1324 = vsel %vm1314, %v1321, %v1323
        %v1325 = vsel %vm1313, %v1303, %v1306
        %v1326 = vsel %vm1316, %v1312, 1326507024
        %v1327 = vsel %vm1315, %v1309, %v1326
        %v1328 = vsel %vm1314, %v1325, %v1327
        %v1329 = vshll.u32 %v1289, 8
        %v1330 = vand.u32 %v1329, 65535
        %v1331 = vshrl.u32 %v1329, 16
        %v1332 = vand.u32 %v1328, 65535
        %v1333 = vshrl.u32 %v1328, 16
        %v1334 = vmul.u32 %v1330, %v1332
        %v1335 = vmul.u32 %v1330, %v1333
        %v1336 = vmul.u32 %v1331, %v1332
        %v1337 = vmul.u32 %v1331, %v1333
        %v1338 = vshll.u32 %v1335, 16
        %v1339 = vshrl.u32 %v1335, 16
        %v1340 = vshll.u32 %v1336, 16
        %v1341 = vshrl.u32 %v1336, 16
        %vm1342 = vc.u32 %v1334, %v1338
        %v1343 = vsel %vm1342, 1, 0
        %v1344 = vadd.s32 %v1334, %v1338
        %v1345 = vadd.s32 %v1337, %v1343
        %vm1346 = vc.u32 %v1344, %v1340
        %v1347 = vsel %vm1346, 1, 0
        %v1348 = vadd.s32 %v1344, %v1340
        %v1349 = vadd.s32 %v1345, %v1347
        %v1350 = vadd.s32 %v1349, %v1339
        %v1351 = vadd.s32 %v1350, %v1341
        %v1352 = vand.u32 %v1329, 65535
        %v1353 = vshrl.u32 %v1329, 16
        %v1354 = vand.u32 %v1324, 65535
        %v1355 = vshrl.u32 %v1324, 16
        %v1356 = vmul.u32 %v1352, %v1354
        %v1357 = vmul.u32 %v1352, %v1355
        %v1358 = vmul.u32 %v1353, %v1354
        %v1359 = vmul.u32 %v1353, %v1355
        %v1360 = vshll.u32 %v1357, 16
        %v1361 = vshrl.u32 %v1357, 16
        %v1362 = vshll.u32 %v1358, 16
        %v1363 = vshrl.u32 %v1358, 16
        %vm1364 = vc.u32 %v1356, %v1360
        %v1365 = vsel %vm1364, 1, 0
        %v1366 = vadd.s32 %v1356, %v1360
        %v1367 = vadd.s32 %v1359, %v1365
        %vm1368 = vc.u32 %v1366, %v1362
        %v1369 = vsel %vm1368, 1, 0
        %v1370 = vadd.s32 %v1366, %v1362
        %v1371 = vadd.s32 %v1367, %v1369
        %v1372 = vadd.s32 %v1371, %v1361
        %v1373 = vadd.s32 %v1372, %v1363
        %v1374 = vmul.u32 %v1329, %v1320
        %v1375 = vadd.s32 %v1351, %v1370
        %vm1376 = vc.u32 %v1351, %v1370
        %v1377 = vadd.s32 %v1373, 1
        %v1378 = vsel %vm1376, %v1377, %v1373
        %v1379 = vadd.s32 %v1374, %v1378
        %v1380 = vadd.s32 %v1379, 536870912
        %v1381 = vshrl.u32 %v1380, 30
        %v1382 = vshll.u32 %v1381, 30
        %v1383 = vsub.s32 %v1379, %v1382
        %vm1384 = vcmp.lt.s32.totalorder %v1383, 0
        %v1385 = vsub.s32 0, %v1383
        %v1386 = vsel %vm1384, %v1385, %v1383
        %v1387 = vclz %v1386
        %v1388 = vsub.s32 %v1387, 2
        %vm1389 = vcmp.gt.s32.totalorder 0, %v1388
        %v1390 = vsel %vm1389, 0, %v1388
        %v1391 = vsub.s32 32, %v1390
        %v1392 = vshll.u32 %v1383, %v1390
        %v1393 = vshrl.u32 %v1375, %v1391
        %v1394 = vor.u32 %v1392, %v1393
        %v1395 = vsub.s32 4294967266, %v1390
        %v1396 = vadd.s32 %v1395, 127
        %v1397 = vshll.u32 %v1396, 23
        %v1398 = vor.u32 4788187, %v1397
        %v1399 = vand.u32 2147483647, %v1398
        %v1401 = vcvt.s32.f32 %v1394
        %v1402 = vmul.f32 %v1401, %v1399
        %v1403 = vxor.u32 %v1402, 2147483648
        %v1404 = vsel %vm1283, %v1403, %v1402
        %v1405 = vsub.s32 4, %v1381
        %v1406 = vsel %vm1283, %v1405, %v1381
        %v1407 = vsel %vm1282, %v894, %v1404
        %v1408 = vsel %vm1282, 0, %v1406
        %v1409 = vmul.f32 %v1407, %v1407
        %v1410 = vmul.f32 %v1409, -0.001358992
        %v1411 = vadd.f32 %v1410, 0.041655596
        %v1412 = vmul.f32 %v1409, %v1411
        %v1413 = vadd.f32 %v1412, -0.4999988
        %v1414 = vmul.f32 %v1409, %v1413
        %v1415 = vadd.f32 1.0, %v1414
        %v1416 = vmul.f32 %v1407, %v1407
        %v1417 = vmul.f32 %v1416, -0.00019511016
        %v1418 = vadd.f32 %v1417, 0.008332121
        %v1419 = vmul.f32 %v1416, %v1418
        %v1420 = vadd.f32 %v1419, -0.16666654
        %v1421 = vmul.f32 %v1416, %v1420
        %v1422 = vadd.f32 %v1421, 1.0
        %v1423 = vmul.f32 %v1422, %v1407
        %vm1424 = vweird.f32 %v894
        %v1425 = vand.u32 %v1408, 3
        %vm1426 = vcmp.lt.s32.totalorder %v1425, 2
        %vm1427 = vcmp.eq.s32.totalorder %v1425, 0
        %v1428 = vxor.u32 %v1423, 2147483648
        %v1429 = vsel %vm1427, %v1415, %v1428
        %vm1430 = vcmp.eq.s32.totalorder %v1425, 2
        %v1431 = vxor.u32 %v1415, 2147483648
        %v1432 = vsel %vm1430, %v1431, %v1423
        %v1433 = vsel %vm1426, %v1429, %v1432
        %v1434 = vsel %vm1424, nan, %v1433
        %v1435 = vand.u32 2147483647, %v895
        %vm1436 = vcmp.le.f32.partialorder %v1435, 0.7853982
        %vm1437 = vcmp.lt.s32.totalorder %v895, 0
        %v1438 = vand.u32 %v895, 2139095040
        %v1439 = vshrl.u32 %v1438, 23
        %v1440 = vsub.s32 %v1439, 127
        %v1441 = vand.u32 2147483647, %v895
        %v1442 = vand.u32 %v1441, 8388607
        %v1443 = vor.u32 %v1442, 8388608
        %v1444 = vsub.s32 0, %v1443
        %v1445 = vadd.s32 %v1440, 1
        %vm1446 = vcmp.gt.s32.totalorder %v1445, 0
        %v1447 = vsel %vm1446, %v1445, 0
        %v1448 = vshrl.u32 %v1447, 5
        %v1449 = vand.u32 %v1447, 31
        %v1450 = vsub.s32 32, %v1449
        %v1451 = vshrl.u32 683565275, %v1450
        %v1452 = vshll.u32 683565275, %v1449
        %v1453 = vshrl.u32 2475754826, %v1450
        %v1454 = vor.u32 %v1452, %v1453
        %v1455 = vshll.u32 2475754826, %v1449
        %v1456 = vshrl.u32 2131351028, %v1450
        %v1457 = vor.u32 %v1455, %v1456
        %v1458 = vshll.u32 2131351028, %v1449
        %v1459 = vshrl.u32 2102212464, %v1450
        %v1460 = vor.u32 %v1458, %v1459
        %v1461 = vshll.u32 2102212464, %v1449
        %v1462 = vshrl.u32 920167782, %v1450
        %v1463 = vor.u32 %v1461, %v1462
        %v1464 = vshll.u32 920167782, %v1449
        %v1465 = vshrl.u32 1326507024, %v1450
        %v1466 = vor.u32 %v1464, %v1465
        %vm1467 = vcmp.lt.s32.totalorder %v1448, 1
        %vm1468 = vcmp.lt.s32.totalorder %v1448, 2
        %vm1469 = vcmp.lt.s32.totalorder %v1448, 3
        %vm1470 = vcmp.lt.s32.totalorder %v1448, 4
        %v1471 = vsel %vm1467, %v1451, %v1454
        %v1472 = vsel %vm1470, %v1460, 2102212464
        %v1473 = vsel %vm1469, %v1457, %v1472
        %v1474 = vsel %vm1468, %v1471, %v1473
        %v1475 = vsel %vm1467, %v1454, %v1457
        %v1476 = vsel %vm1470, %v1463, 920167782
        %v1477 = vsel %vm1469, %v1460, %v1476
        %v1478 = vsel %vm1468, %v1475, %v1477
        %v1479 = vsel %vm1467, %v1457, %v1460
        %v1480 = vsel %vm1470, %v1466, 1326507024
        %v1481 = vsel %vm1469, %v1463, %v1480
        %v1482 = vsel %vm1468, %v1479, %v1481
        %v1483 = vshll.u32 %v1443, 8
        %v1484 = vand.u32 %v1483, 65535
        %v1485 = vshrl.u32 %v1483, 16
        %v1486 = vand.u32 %v1482, 65535
        %v1487 = vshrl.u32 %v1482, 16
        %v1488 = vmul.u32 %v1484, %v1486
        %v1489 = vmul.u32 %v1484, %v1487
        %v1490 = vmul.u32 %v1485, %v1486
        %v1491 = vmul.u32 %v1485, %v1487
        %v1492 = vshll.u32 %v1489, 16
        %v1493 = vshrl.u32 %v1489, 16
        %v1494 = vshll.u32 %v1490, 16
        %v1495 = vshrl.u32 %v1490, 16
        %vm1496 = vc.u32 %v1488, %v1492
        %v1497 = vsel %vm1496, 1, 0
        %v1498 = vadd.s32 %v1488, %v1492
        %v1499 = vadd.s32 %v1491, %v1497
        %vm1500 = vc.u32 %v1498, %v1494
        %v1501 = vsel %vm1500, 1, 0
        %v1502 = vadd.s32 %v1498, %v1494
        %v1503 = vadd.s32 %v1499, %v1501
        %v1504 = vadd.s32 %v1503, %v1493
        %v1505 = vadd.s32 %v1504, %v1495
        %v1506 = vand.u32 %v1483, 65535
        %v1507 = vshrl.u32 %v1483, 16
        %v1508 = vand.u32 %v1478, 65535
        %v1509 = vshrl.u32 %v1478, 16
        %v1510 = vmul.u32 %v1506, %v1508
        %v1511 = vmul.u32 %v1506, %v1509
        %v1512 = vmul.u32 %v1507, %v1508
        %v1513 = vmul.u32 %v1507, %v1509
        %v1514 = vshll.u32 %v1511, 16
        %v1515 = vshrl.u32 %v1511, 16
        %v1516 = vshll.u32 %v1512, 16
        %v1517 = vshrl.u32 %v1512, 16
        %vm1518 = vc.u32 %v1510, %v1514
        %v1519 = vsel %vm1518, 1, 0
        %v1520 = vadd.s32 %v1510, %v1514
        %v1521 = vadd.s32 %v1513, %v1519
        %vm1522 = vc.u32 %v1520, %v1516
        %v1523 = vsel %vm1522, 1, 0
        %v1524 = vadd.s32 %v1520, %v1516
        %v1525 = vadd.s32 %v1521, %v1523
        %v1526 = vadd.s32 %v1525, %v1515
        %v1527 = vadd.s32 %v1526, %v1517
        %v1528 = vmul.u32 %v1483, %v1474
        %v1529 = vadd.s32 %v1505, %v1524
        %vm1530 = vc.u32 %v1505, %v1524
        %v1531 = vadd.s32 %v1527, 1
        %v1532 = vsel %vm1530, %v1531, %v1527
        %v1533 = vadd.s32 %v1528, %v1532
        %v1534 = vadd.s32 %v1533, 536870912
        %v1535 = vshrl.u32 %v1534, 30
        %v1536 = vshll.u32 %v1535, 30
        %v1537 = vsub.s32 %v1533, %v1536
        %vm1538 = vcmp.lt.s32.totalorder %v1537, 0
        %v1539 = vsub.s32 0, %v1537
        %v1540 = vsel %vm1538, %v1539, %v1537
        %v1541 = vclz %v1540
        %v1542 = vsub.s32 %v1541, 2
        %vm1543 = vcmp.gt.s32.totalorder 0, %v1542
        %v1544 = vsel %vm1543, 0, %v1542
        %v1545 = vsub.s32 32, %v1544
        %v1546 = vshll.u32 %v1537, %v1544
        %v1547 = vshrl.u32 %v1529, %v1545
        %v1548 = vor.u32 %v1546, %v1547
        %v1549 = vsub.s32 4294967266, %v1544
        %v1550 = vadd.s32 %v1549, 127
        %v1551 = vshll.u32 %v1550, 23
        %v1552 = vor.u32 4788187, %v1551
        %v1553 = vand.u32 2147483647, %v1552
        %v1555 = vcvt.s32.f32 %v1548
        %v1556 = vmul.f32 %v1555, %v1553
        %v1557 = vxor.u32 %v1556, 2147483648
        %v1558 = vsel %vm1437, %v1557, %v1556
        %v1559 = vsub.s32 4, %v1535
        %v1560 = vsel %vm1437, %v1559, %v1535
        %v1561 = vsel %vm1436, %v895, %v1558
        %v1562 = vsel %vm1436, 0, %v1560
        %v1563 = vmul.f32 %v1561, %v1561
        %v1564 = vmul.f32 %v1563, -0.001358992
        %v1565 = vadd.f32 %v1564, 0.041655596
        %v1566 = vmul.f32 %v1563, %v1565
        %v1567 = vadd.f32 %v1566, -0.4999988
        %v1568 = vmul.f32 %v1563, %v1567
        %v1569 = vadd.f32 1.0, %v1568
        %v1570 = vmul.f32 %v1561, %v1561
        %v1571 = vmul.f32 %v1570, -0.00019511016
        %v1572 = vadd.f32 %v1571, 0.008332121
        %v1573 = vmul.f32 %v1570, %v1572
        %v1574 = vadd.f32 %v1573, -0.16666654
        %v1575 = vmul.f32 %v1570, %v1574
        %v1576 = vadd.f32 %v1575, 1.0
        %v1577 = vmul.f32 %v1576, %v1561
        %vm1578 = vweird.f32 %v895
        %v1579 = vand.u32 %v1562, 3
        %vm1580 = vcmp.lt.s32.totalorder %v1579, 2
        %vm1581 = vcmp.eq.s32.totalorder %v1579, 0
        %v1582 = vxor.u32 %v1577, 2147483648
        %v1583 = vsel %vm1581, %v1569, %v1582
        %vm1584 = vcmp.eq.s32.totalorder %v1579, 2
        %v1585 = vxor.u32 %v1569, 2147483648
        %v1586 = vsel %vm1584, %v1585, %v1577
        %v1587 = vsel %vm1580, %v1583, %v1586
        %v1588 = vsel %vm1578, nan, %v1587
        %1591 = vrot.lane.b32.xlu0 %v1434, 24
        %v1592 = vpop.permute.xlu0 %1591
        %1593 = vrot.lane.b32.xlu0 %v1588, 24
        %v1594 = vpop.permute.xlu0 %1593
        %vm1597 = vcmask 392384
        %1598 = vst.msk [vmem:[%s234] sm:$0xff] %vm1597, %v1592
        %1599 = vst.msk [vmem:[%s234 + $0x8] sm:$0xff] %vm1597, %v1594
        %1602 = vrot.lane.b32.xlu0 %v761, 48
        %v1603 = vpop.permute.xlu0 %1602
        %1604 = vrot.lane.b32.xlu0 %v762, 48
        %v1605 = vpop.permute.xlu0 %1604
        %vm1608 = vcmask 425344
        %1609 = vst.msk [vmem:[%s234] sm:$0xff] %vm1608, %v1603
        %1610 = vst.msk [vmem:[%s234 + $0x8] sm:$0xff] %vm1608, %v1605
        %1613 = vrot.lane.b32.xlu0 %v795, 52
        %v1614 = vpop.permute.xlu0 %1613
        %1615 = vrot.lane.b32.xlu0 %v796, 52
        %v1616 = vpop.permute.xlu0 %1615
        %vm1619 = vcmask 458144
        %1620 = vst.msk [vmem:[%s234] sm:$0xff] %vm1619, %v1614
        %1621 = vst.msk [vmem:[%s234 + $0x8] sm:$0xff] %vm1619, %v1616
        %1624 = vrot.lane.b32.xlu0 %v829, 56
        %v1625 = vpop.permute.xlu0 %1624
        %1626 = vrot.lane.b32.xlu0 %v830, 56
        %v1627 = vpop.permute.xlu0 %1626
        %vm1630 = vcmask 490944
        %1631 = vst.msk [vmem:[%s234] sm:$0xff] %vm1630, %v1625
        %1632 = vst.msk [vmem:[%s234 + $0x8] sm:$0xff] %vm1630, %v1627
        %v1633 = vand.u32 2147483647, %v967
        %vm1634 = vcmp.le.f32.partialorder %v1633, 0.7853982
        %vm1635 = vcmp.lt.s32.totalorder %v967, 0
        %v1636 = vand.u32 %v967, 2139095040
        %v1637 = vshrl.u32 %v1636, 23
        %v1638 = vsub.s32 %v1637, 127
        %v1639 = vand.u32 2147483647, %v967
        %v1640 = vand.u32 %v1639, 8388607
        %v1641 = vor.u32 %v1640, 8388608
        %v1642 = vsub.s32 0, %v1641
        %v1643 = vadd.s32 %v1638, 1
        %vm1644 = vcmp.gt.s32.totalorder %v1643, 0
        %v1645 = vsel %vm1644, %v1643, 0
        %v1646 = vshrl.u32 %v1645, 5
        %v1647 = vand.u32 %v1645, 31
        %v1648 = vsub.s32 32, %v1647
        %v1649 = vshrl.u32 683565275, %v1648
        %v1650 = vshll.u32 683565275, %v1647
        %v1651 = vshrl.u32 2475754826, %v1648
        %v1652 = vor.u32 %v1650, %v1651
        %v1653 = vshll.u32 2475754826, %v1647
        %v1654 = vshrl.u32 2131351028, %v1648
        %v1655 = vor.u32 %v1653, %v1654
        %v1656 = vshll.u32 2131351028, %v1647
        %v1657 = vshrl.u32 2102212464, %v1648
        %v1658 = vor.u32 %v1656, %v1657
        %v1659 = vshll.u32 2102212464, %v1647
        %v1660 = vshrl.u32 920167782, %v1648
        %v1661 = vor.u32 %v1659, %v1660
        %v1662 = vshll.u32 920167782, %v1647
        %v1663 = vshrl.u32 1326507024, %v1648
        %v1664 = vor.u32 %v1662, %v1663
        %vm1665 = vcmp.lt.s32.totalorder %v1646, 1
        %vm1666 = vcmp.lt.s32.totalorder %v1646, 2
        %vm1667 = vcmp.lt.s32.totalorder %v1646, 3
        %vm1668 = vcmp.lt.s32.totalorder %v1646, 4
        %v1669 = vsel %vm1665, %v1649, %v1652
        %v1670 = vsel %vm1668, %v1658, 2102212464
        %v1671 = vsel %vm1667, %v1655, %v1670
        %v1672 = vsel %vm1666, %v1669, %v1671
        %v1673 = vsel %vm1665, %v1652, %v1655
        %v1674 = vsel %vm1668, %v1661, 920167782
        %v1675 = vsel %vm1667, %v1658, %v1674
        %v1676 = vsel %vm1666, %v1673, %v1675
        %v1677 = vsel %vm1665, %v1655, %v1658
        %v1678 = vsel %vm1668, %v1664, 1326507024
        %v1679 = vsel %vm1667, %v1661, %v1678
        %v1680 = vsel %vm1666, %v1677, %v1679
        %v1681 = vshll.u32 %v1641, 8
        %v1682 = vand.u32 %v1681, 65535
        %v1683 = vshrl.u32 %v1681, 16
        %v1684 = vand.u32 %v1680, 65535
        %v1685 = vshrl.u32 %v1680, 16
        %v1686 = vmul.u32 %v1682, %v1684
        %v1687 = vmul.u32 %v1682, %v1685
        %v1688 = vmul.u32 %v1683, %v1684
        %v1689 = vmul.u32 %v1683, %v1685
        %v1690 = vshll.u32 %v1687, 16
        %v1691 = vshrl.u32 %v1687, 16
        %v1692 = vshll.u32 %v1688, 16
        %v1693 = vshrl.u32 %v1688, 16
        %vm1694 = vc.u32 %v1686, %v1690
        %v1695 = vsel %vm1694, 1, 0
        %v1696 = vadd.s32 %v1686, %v1690
        %v1697 = vadd.s32 %v1689, %v1695
        %vm1698 = vc.u32 %v1696, %v1692
        %v1699 = vsel %vm1698, 1, 0
        %v1700 = vadd.s32 %v1696, %v1692
        %v1701 = vadd.s32 %v1697, %v1699
        %v1702 = vadd.s32 %v1701, %v1691
        %v1703 = vadd.s32 %v1702, %v1693
        %v1704 = vand.u32 %v1681, 65535
        %v1705 = vshrl.u32 %v1681, 16
        %v1706 = vand.u32 %v1676, 65535
        %v1707 = vshrl.u32 %v1676, 16
        %v1708 = vmul.u32 %v1704, %v1706
        %v1709 = vmul.u32 %v1704, %v1707
        %v1710 = vmul.u32 %v1705, %v1706
        %v1711 = vmul.u32 %v1705, %v1707
        %v1712 = vshll.u32 %v1709, 16
        %v1713 = vshrl.u32 %v1709, 16
        %v1714 = vshll.u32 %v1710, 16
        %v1715 = vshrl.u32 %v1710, 16
        %vm1716 = vc.u32 %v1708, %v1712
        %v1717 = vsel %vm1716, 1, 0
        %v1718 = vadd.s32 %v1708, %v1712
        %v1719 = vadd.s32 %v1711, %v1717
        %vm1720 = vc.u32 %v1718, %v1714
        %v1721 = vsel %vm1720, 1, 0
        %v1722 = vadd.s32 %v1718, %v1714
        %v1723 = vadd.s32 %v1719, %v1721
        %v1724 = vadd.s32 %v1723, %v1713
        %v1725 = vadd.s32 %v1724, %v1715
        %v1726 = vmul.u32 %v1681, %v1672
        %v1727 = vadd.s32 %v1703, %v1722
        %vm1728 = vc.u32 %v1703, %v1722
        %v1729 = vadd.s32 %v1725, 1
        %v1730 = vsel %vm1728, %v1729, %v1725
        %v1731 = vadd.s32 %v1726, %v1730
        %v1732 = vadd.s32 %v1731, 536870912
        %v1733 = vshrl.u32 %v1732, 30
        %v1734 = vshll.u32 %v1733, 30
        %v1735 = vsub.s32 %v1731, %v1734
        %vm1736 = vcmp.lt.s32.totalorder %v1735, 0
        %v1737 = vsub.s32 0, %v1735
        %v1738 = vsel %vm1736, %v1737, %v1735
        %v1739 = vclz %v1738
        %v1740 = vsub.s32 %v1739, 2
        %vm1741 = vcmp.gt.s32.totalorder 0, %v1740
        %v1742 = vsel %vm1741, 0, %v1740
        %v1743 = vsub.s32 32, %v1742
        %v1744 = vshll.u32 %v1735, %v1742
        %v1745 = vshrl.u32 %v1727, %v1743
        %v1746 = vor.u32 %v1744, %v1745
        %v1747 = vsub.s32 4294967266, %v1742
        %v1748 = vadd.s32 %v1747, 127
        %v1749 = vshll.u32 %v1748, 23
        %v1750 = vor.u32 4788187, %v1749
        %v1751 = vand.u32 2147483647, %v1750
        %v1753 = vcvt.s32.f32 %v1746
        %v1754 = vmul.f32 %v1753, %v1751
        %v1755 = vxor.u32 %v1754, 2147483648
        %v1756 = vsel %vm1635, %v1755, %v1754
        %v1757 = vsub.s32 4, %v1733
        %v1758 = vsel %vm1635, %v1757, %v1733
        %v1759 = vsel %vm1634, %v967, %v1756
        %v1760 = vsel %vm1634, 0, %v1758
        %v1761 = vmul.f32 %v1759, %v1759
        %v1762 = vmul.f32 %v1761, -0.001358992
        %v1763 = vadd.f32 %v1762, 0.041655596
        %v1764 = vmul.f32 %v1761, %v1763
        %v1765 = vadd.f32 %v1764, -0.4999988
        %v1766 = vmul.f32 %v1761, %v1765
        %v1767 = vadd.f32 1.0, %v1766
        %v1768 = vmul.f32 %v1759, %v1759
        %v1769 = vmul.f32 %v1768, -0.00019511016
        %v1770 = vadd.f32 %v1769, 0.008332121
        %v1771 = vmul.f32 %v1768, %v1770
        %v1772 = vadd.f32 %v1771, -0.16666654
        %v1773 = vmul.f32 %v1768, %v1772
        %v1774 = vadd.f32 %v1773, 1.0
        %v1775 = vmul.f32 %v1774, %v1759
        %vm1776 = vweird.f32 %v967
        %v1777 = vadd.s32 %v1760, 3
        %v1778 = vand.u32 %v1777, 3
        %vm1779 = vcmp.lt.s32.totalorder %v1778, 2
        %vm1780 = vcmp.eq.s32.totalorder %v1778, 0
        %v1781 = vxor.u32 %v1775, 2147483648
        %v1782 = vsel %vm1780, %v1767, %v1781
        %vm1783 = vcmp.eq.s32.totalorder %v1778, 2
        %v1784 = vxor.u32 %v1767, 2147483648
        %v1785 = vsel %vm1783, %v1784, %v1775
        %v1786 = vsel %vm1779, %v1782, %v1785
        %v1787 = vsel %vm1776, nan, %v1786
        %v1788 = vand.u32 2147483647, %v968
        %vm1789 = vcmp.le.f32.partialorder %v1788, 0.7853982
        %vm1790 = vcmp.lt.s32.totalorder %v968, 0
        %v1791 = vand.u32 %v968, 2139095040
        %v1792 = vshrl.u32 %v1791, 23
        %v1793 = vsub.s32 %v1792, 127
        %v1794 = vand.u32 2147483647, %v968
        %v1795 = vand.u32 %v1794, 8388607
        %v1796 = vor.u32 %v1795, 8388608
        %v1797 = vsub.s32 0, %v1796
        %v1798 = vadd.s32 %v1793, 1
        %vm1799 = vcmp.gt.s32.totalorder %v1798, 0
        %v1800 = vsel %vm1799, %v1798, 0
        %v1801 = vshrl.u32 %v1800, 5
        %v1802 = vand.u32 %v1800, 31
        %v1803 = vsub.s32 32, %v1802
        %v1804 = vshrl.u32 683565275, %v1803
        %v1805 = vshll.u32 683565275, %v1802
        %v1806 = vshrl.u32 2475754826, %v1803
        %v1807 = vor.u32 %v1805, %v1806
        %v1808 = vshll.u32 2475754826, %v1802
        %v1809 = vshrl.u32 2131351028, %v1803
        %v1810 = vor.u32 %v1808, %v1809
        %v1811 = vshll.u32 2131351028, %v1802
        %v1812 = vshrl.u32 2102212464, %v1803
        %v1813 = vor.u32 %v1811, %v1812
        %v1814 = vshll.u32 2102212464, %v1802
        %v1815 = vshrl.u32 920167782, %v1803
        %v1816 = vor.u32 %v1814, %v1815
        %v1817 = vshll.u32 920167782, %v1802
        %v1818 = vshrl.u32 1326507024, %v1803
        %v1819 = vor.u32 %v1817, %v1818
        %vm1820 = vcmp.lt.s32.totalorder %v1801, 1
        %vm1821 = vcmp.lt.s32.totalorder %v1801, 2
        %vm1822 = vcmp.lt.s32.totalorder %v1801, 3
        %vm1823 = vcmp.lt.s32.totalorder %v1801, 4
        %v1824 = vsel %vm1820, %v1804, %v1807
        %v1825 = vsel %vm1823, %v1813, 2102212464
        %v1826 = vsel %vm1822, %v1810, %v1825
        %v1827 = vsel %vm1821, %v1824, %v1826
        %v1828 = vsel %vm1820, %v1807, %v1810
        %v1829 = vsel %vm1823, %v1816, 920167782
        %v1830 = vsel %vm1822, %v1813, %v1829
        %v1831 = vsel %vm1821, %v1828, %v1830
        %v1832 = vsel %vm1820, %v1810, %v1813
        %v1833 = vsel %vm1823, %v1819, 1326507024
        %v1834 = vsel %vm1822, %v1816, %v1833
        %v1835 = vsel %vm1821, %v1832, %v1834
        %v1836 = vshll.u32 %v1796, 8
        %v1837 = vand.u32 %v1836, 65535
        %v1838 = vshrl.u32 %v1836, 16
        %v1839 = vand.u32 %v1835, 65535
        %v1840 = vshrl.u32 %v1835, 16
        %v1841 = vmul.u32 %v1837, %v1839
        %v1842 = vmul.u32 %v1837, %v1840
        %v1843 = vmul.u32 %v1838, %v1839
        %v1844 = vmul.u32 %v1838, %v1840
        %v1845 = vshll.u32 %v1842, 16
        %v1846 = vshrl.u32 %v1842, 16
        %v1847 = vshll.u32 %v1843, 16
        %v1848 = vshrl.u32 %v1843, 16
        %vm1849 = vc.u32 %v1841, %v1845
        %v1850 = vsel %vm1849, 1, 0
        %v1851 = vadd.s32 %v1841, %v1845
        %v1852 = vadd.s32 %v1844, %v1850
        %vm1853 = vc.u32 %v1851, %v1847
        %v1854 = vsel %vm1853, 1, 0
        %v1855 = vadd.s32 %v1851, %v1847
        %v1856 = vadd.s32 %v1852, %v1854
        %v1857 = vadd.s32 %v1856, %v1846
        %v1858 = vadd.s32 %v1857, %v1848
        %v1859 = vand.u32 %v1836, 65535
        %v1860 = vshrl.u32 %v1836, 16
        %v1861 = vand.u32 %v1831, 65535
        %v1862 = vshrl.u32 %v1831, 16
        %v1863 = vmul.u32 %v1859, %v1861
        %v1864 = vmul.u32 %v1859, %v1862
        %v1865 = vmul.u32 %v1860, %v1861
        %v1866 = vmul.u32 %v1860, %v1862
        %v1867 = vshll.u32 %v1864, 16
        %v1868 = vshrl.u32 %v1864, 16
        %v1869 = vshll.u32 %v1865, 16
        %v1870 = vshrl.u32 %v1865, 16
        %vm1871 = vc.u32 %v1863, %v1867
        %v1872 = vsel %vm1871, 1, 0
        %v1873 = vadd.s32 %v1863, %v1867
        %v1874 = vadd.s32 %v1866, %v1872
        %vm1875 = vc.u32 %v1873, %v1869
        %v1876 = vsel %vm1875, 1, 0
        %v1877 = vadd.s32 %v1873, %v1869
        %v1878 = vadd.s32 %v1874, %v1876
        %v1879 = vadd.s32 %v1878, %v1868
        %v1880 = vadd.s32 %v1879, %v1870
        %v1881 = vmul.u32 %v1836, %v1827
        %v1882 = vadd.s32 %v1858, %v1877
        %vm1883 = vc.u32 %v1858, %v1877
        %v1884 = vadd.s32 %v1880, 1
        %v1885 = vsel %vm1883, %v1884, %v1880
        %v1886 = vadd.s32 %v1881, %v1885
        %v1887 = vadd.s32 %v1886, 536870912
        %v1888 = vshrl.u32 %v1887, 30
        %v1889 = vshll.u32 %v1888, 30
        %v1890 = vsub.s32 %v1886, %v1889
        %vm1891 = vcmp.lt.s32.totalorder %v1890, 0
        %v1892 = vsub.s32 0, %v1890
        %v1893 = vsel %vm1891, %v1892, %v1890
        %v1894 = vclz %v1893
        %v1895 = vsub.s32 %v1894, 2
        %vm1896 = vcmp.gt.s32.totalorder 0, %v1895
        %v1897 = vsel %vm1896, 0, %v1895
        %v1898 = vsub.s32 32, %v1897
        %v1899 = vshll.u32 %v1890, %v1897
        %v1900 = vshrl.u32 %v1882, %v1898
        %v1901 = vor.u32 %v1899, %v1900
        %v1902 = vsub.s32 4294967266, %v1897
        %v1903 = vadd.s32 %v1902, 127
        %v1904 = vshll.u32 %v1903, 23
        %v1905 = vor.u32 4788187, %v1904
        %v1906 = vand.u32 2147483647, %v1905
        %v1908 = vcvt.s32.f32 %v1901
        %v1909 = vmul.f32 %v1908, %v1906
        %v1910 = vxor.u32 %v1909, 2147483648
        %v1911 = vsel %vm1790, %v1910, %v1909
        %v1912 = vsub.s32 4, %v1888
        %v1913 = vsel %vm1790, %v1912, %v1888
        %v1914 = vsel %vm1789, %v968, %v1911
        %v1915 = vsel %vm1789, 0, %v1913
        %v1916 = vmul.f32 %v1914, %v1914
        %v1917 = vmul.f32 %v1916, -0.001358992
        %v1918 = vadd.f32 %v1917, 0.041655596
        %v1919 = vmul.f32 %v1916, %v1918
        %v1920 = vadd.f32 %v1919, -0.4999988
        %v1921 = vmul.f32 %v1916, %v1920
        %v1922 = vadd.f32 1.0, %v1921
        %v1923 = vmul.f32 %v1914, %v1914
        %v1924 = vmul.f32 %v1923, -0.00019511016
        %v1925 = vadd.f32 %v1924, 0.008332121
        %v1926 = vmul.f32 %v1923, %v1925
        %v1927 = vadd.f32 %v1926, -0.16666654
        %v1928 = vmul.f32 %v1923, %v1927
        %v1929 = vadd.f32 %v1928, 1.0
        %v1930 = vmul.f32 %v1929, %v1914
        %vm1931 = vweird.f32 %v968
        %v1932 = vadd.s32 %v1915, 3
        %v1933 = vand.u32 %v1932, 3
        %vm1934 = vcmp.lt.s32.totalorder %v1933, 2
        %vm1935 = vcmp.eq.s32.totalorder %v1933, 0
        %v1936 = vxor.u32 %v1930, 2147483648
        %v1937 = vsel %vm1935, %v1922, %v1936
        %vm1938 = vcmp.eq.s32.totalorder %v1933, 2
        %v1939 = vxor.u32 %v1922, 2147483648
        %v1940 = vsel %vm1938, %v1939, %v1930
        %v1941 = vsel %vm1934, %v1937, %v1940
        %v1942 = vsel %vm1931, nan, %v1941
        %1945 = vrot.lane.b32.xlu0 %v1787, 60
        %v1946 = vpop.permute.xlu0 %1945
        %1947 = vrot.lane.b32.xlu0 %v1942, 60
        %v1948 = vpop.permute.xlu0 %1947
        %vm1951 = vcmask 753120
        %1952 = vst.msk [vmem:[%s234] sm:$0xff] %vm1951, %v1946
        %1953 = vst.msk [vmem:[%s234 + $0x8] sm:$0xff] %vm1951, %v1948
        %v1954 = vand.u32 2147483647, %v967
        %vm1955 = vcmp.le.f32.partialorder %v1954, 0.7853982
        %vm1956 = vcmp.lt.s32.totalorder %v967, 0
        %v1957 = vand.u32 %v967, 2139095040
        %v1958 = vshrl.u32 %v1957, 23
        %v1959 = vsub.s32 %v1958, 127
        %v1960 = vand.u32 2147483647, %v967
        %v1961 = vand.u32 %v1960, 8388607
        %v1962 = vor.u32 %v1961, 8388608
        %v1963 = vsub.s32 0, %v1962
        %v1964 = vadd.s32 %v1959, 1
        %vm1965 = vcmp.gt.s32.totalorder %v1964, 0
        %v1966 = vsel %vm1965, %v1964, 0
        %v1967 = vshrl.u32 %v1966, 5
        %v1968 = vand.u32 %v1966, 31
        %v1969 = vsub.s32 32, %v1968
        %v1970 = vshrl.u32 683565275, %v1969
        %v1971 = vshll.u32 683565275, %v1968
        %v1972 = vshrl.u32 2475754826, %v1969
        %v1973 = vor.u32 %v1971, %v1972
        %v1974 = vshll.u32 2475754826, %v1968
        %v1975 = vshrl.u32 2131351028, %v1969
        %v1976 = vor.u32 %v1974, %v1975
        %v1977 = vshll.u32 2131351028, %v1968
        %v1978 = vshrl.u32 2102212464, %v1969
        %v1979 = vor.u32 %v1977, %v1978
        %v1980 = vshll.u32 2102212464, %v1968
        %v1981 = vshrl.u32 920167782, %v1969
        %v1982 = vor.u32 %v1980, %v1981
        %v1983 = vshll.u32 920167782, %v1968
        %v1984 = vshrl.u32 1326507024, %v1969
        %v1985 = vor.u32 %v1983, %v1984
        %vm1986 = vcmp.lt.s32.totalorder %v1967, 1
        %vm1987 = vcmp.lt.s32.totalorder %v1967, 2
        %vm1988 = vcmp.lt.s32.totalorder %v1967, 3
        %vm1989 = vcmp.lt.s32.totalorder %v1967, 4
        %v1990 = vsel %vm1986, %v1970, %v1973
        %v1991 = vsel %vm1989, %v1979, 2102212464
        %v1992 = vsel %vm1988, %v1976, %v1991
        %v1993 = vsel %vm1987, %v1990, %v1992
        %v1994 = vsel %vm1986, %v1973, %v1976
        %v1995 = vsel %vm1989, %v1982, 920167782
        %v1996 = vsel %vm1988, %v1979, %v1995
        %v1997 = vsel %vm1987, %v1994, %v1996
        %v1998 = vsel %vm1986, %v1976, %v1979
        %v1999 = vsel %vm1989, %v1985, 1326507024
        %v2000 = vsel %vm1988, %v1982, %v1999
        %v2001 = vsel %vm1987, %v1998, %v2000
        %v2002 = vshll.u32 %v1962, 8
        %v2003 = vand.u32 %v2002, 65535
        %v2004 = vshrl.u32 %v2002, 16
        %v2005 = vand.u32 %v2001, 65535
        %v2006 = vshrl.u32 %v2001, 16
        %v2007 = vmul.u32 %v2003, %v2005
        %v2008 = vmul.u32 %v2003, %v2006
        %v2009 = vmul.u32 %v2004, %v2005
        %v2010 = vmul.u32 %v2004, %v2006
        %v2011 = vshll.u32 %v2008, 16
        %v2012 = vshrl.u32 %v2008, 16
        %v2013 = vshll.u32 %v2009, 16
        %v2014 = vshrl.u32 %v2009, 16
        %vm2015 = vc.u32 %v2007, %v2011
        %v2016 = vsel %vm2015, 1, 0
        %v2017 = vadd.s32 %v2007, %v2011
        %v2018 = vadd.s32 %v2010, %v2016
        %vm2019 = vc.u32 %v2017, %v2013
        %v2020 = vsel %vm2019, 1, 0
        %v2021 = vadd.s32 %v2017, %v2013
        %v2022 = vadd.s32 %v2018, %v2020
        %v2023 = vadd.s32 %v2022, %v2012
        %v2024 = vadd.s32 %v2023, %v2014
        %v2025 = vand.u32 %v2002, 65535
        %v2026 = vshrl.u32 %v2002, 16
        %v2027 = vand.u32 %v1997, 65535
        %v2028 = vshrl.u32 %v1997, 16
        %v2029 = vmul.u32 %v2025, %v2027
        %v2030 = vmul.u32 %v2025, %v2028
        %v2031 = vmul.u32 %v2026, %v2027
        %v2032 = vmul.u32 %v2026, %v2028
        %v2033 = vshll.u32 %v2030, 16
        %v2034 = vshrl.u32 %v2030, 16
        %v2035 = vshll.u32 %v2031, 16
        %v2036 = vshrl.u32 %v2031, 16
        %vm2037 = vc.u32 %v2029, %v2033
        %v2038 = vsel %vm2037, 1, 0
        %v2039 = vadd.s32 %v2029, %v2033
        %v2040 = vadd.s32 %v2032, %v2038
        %vm2041 = vc.u32 %v2039, %v2035
        %v2042 = vsel %vm2041, 1, 0
        %v2043 = vadd.s32 %v2039, %v2035
        %v2044 = vadd.s32 %v2040, %v2042
        %v2045 = vadd.s32 %v2044, %v2034
        %v2046 = vadd.s32 %v2045, %v2036
        %v2047 = vmul.u32 %v2002, %v1993
        %v2048 = vadd.s32 %v2024, %v2043
        %vm2049 = vc.u32 %v2024, %v2043
        %v2050 = vadd.s32 %v2046, 1
        %v2051 = vsel %vm2049, %v2050, %v2046
        %v2052 = vadd.s32 %v2047, %v2051
        %v2053 = vadd.s32 %v2052, 536870912
        %v2054 = vshrl.u32 %v2053, 30
        %v2055 = vshll.u32 %v2054, 30
        %v2056 = vsub.s32 %v2052, %v2055
        %vm2057 = vcmp.lt.s32.totalorder %v2056, 0
        %v2058 = vsub.s32 0, %v2056
        %v2059 = vsel %vm2057, %v2058, %v2056
        %v2060 = vclz %v2059
        %v2061 = vsub.s32 %v2060, 2
        %vm2062 = vcmp.gt.s32.totalorder 0, %v2061
        %v2063 = vsel %vm2062, 0, %v2061
        %v2064 = vsub.s32 32, %v2063
        %v2065 = vshll.u32 %v2056, %v2063
        %v2066 = vshrl.u32 %v2048, %v2064
        %v2067 = vor.u32 %v2065, %v2066
        %v2068 = vsub.s32 4294967266, %v2063
        %v2069 = vadd.s32 %v2068, 127
        %v2070 = vshll.u32 %v2069, 23
        %v2071 = vor.u32 4788187, %v2070
        %v2072 = vand.u32 2147483647, %v2071
        %v2074 = vcvt.s32.f32 %v2067
        %v2075 = vmul.f32 %v2074, %v2072
        %v2076 = vxor.u32 %v2075, 2147483648
        %v2077 = vsel %vm1956, %v2076, %v2075
        %v2078 = vsub.s32 4, %v2054
        %v2079 = vsel %vm1956, %v2078, %v2054
        %v2080 = vsel %vm1955, %v967, %v2077
        %v2081 = vsel %vm1955, 0, %v2079
        %v2082 = vmul.f32 %v2080, %v2080
        %v2083 = vmul.f32 %v2082, -0.001358992
        %v2084 = vadd.f32 %v2083, 0.041655596
        %v2085 = vmul.f32 %v2082, %v2084
        %v2086 = vadd.f32 %v2085, -0.4999988
        %v2087 = vmul.f32 %v2082, %v2086
        %v2088 = vadd.f32 1.0, %v2087
        %v2089 = vmul.f32 %v2080, %v2080
        %v2090 = vmul.f32 %v2089, -0.00019511016
        %v2091 = vadd.f32 %v2090, 0.008332121
        %v2092 = vmul.f32 %v2089, %v2091
        %v2093 = vadd.f32 %v2092, -0.16666654
        %v2094 = vmul.f32 %v2089, %v2093
        %v2095 = vadd.f32 %v2094, 1.0
        %v2096 = vmul.f32 %v2095, %v2080
        %vm2097 = vweird.f32 %v967
        %v2098 = vand.u32 %v2081, 3
        %vm2099 = vcmp.lt.s32.totalorder %v2098, 2
        %vm2100 = vcmp.eq.s32.totalorder %v2098, 0
        %v2101 = vxor.u32 %v2096, 2147483648
        %v2102 = vsel %vm2100, %v2088, %v2101
        %vm2103 = vcmp.eq.s32.totalorder %v2098, 2
        %v2104 = vxor.u32 %v2088, 2147483648
        %v2105 = vsel %vm2103, %v2104, %v2096
        %v2106 = vsel %vm2099, %v2102, %v2105
        %v2107 = vsel %vm2097, nan, %v2106
        %v2108 = vand.u32 2147483647, %v968
        %vm2109 = vcmp.le.f32.partialorder %v2108, 0.7853982
        %vm2110 = vcmp.lt.s32.totalorder %v968, 0
        %v2111 = vand.u32 %v968, 2139095040
        %v2112 = vshrl.u32 %v2111, 23
        %v2113 = vsub.s32 %v2112, 127
        %v2114 = vand.u32 2147483647, %v968
        %v2115 = vand.u32 %v2114, 8388607
        %v2116 = vor.u32 %v2115, 8388608
        %v2117 = vsub.s32 0, %v2116
        %v2118 = vadd.s32 %v2113, 1
        %vm2119 = vcmp.gt.s32.totalorder %v2118, 0
        %v2120 = vsel %vm2119, %v2118, 0
        %v2121 = vshrl.u32 %v2120, 5
        %v2122 = vand.u32 %v2120, 31
        %v2123 = vsub.s32 32, %v2122
        %v2124 = vshrl.u32 683565275, %v2123
        %v2125 = vshll.u32 683565275, %v2122
        %v2126 = vshrl.u32 2475754826, %v2123
        %v2127 = vor.u32 %v2125, %v2126
        %v2128 = vshll.u32 2475754826, %v2122
        %v2129 = vshrl.u32 2131351028, %v2123
        %v2130 = vor.u32 %v2128, %v2129
        %v2131 = vshll.u32 2131351028, %v2122
        %v2132 = vshrl.u32 2102212464, %v2123
        %v2133 = vor.u32 %v2131, %v2132
        %v2134 = vshll.u32 2102212464, %v2122
        %v2135 = vshrl.u32 920167782, %v2123
        %v2136 = vor.u32 %v2134, %v2135
        %v2137 = vshll.u32 920167782, %v2122
        %v2138 = vshrl.u32 1326507024, %v2123
        %v2139 = vor.u32 %v2137, %v2138
        %vm2140 = vcmp.lt.s32.totalorder %v2121, 1
        %vm2141 = vcmp.lt.s32.totalorder %v2121, 2
        %vm2142 = vcmp.lt.s32.totalorder %v2121, 3
        %vm2143 = vcmp.lt.s32.totalorder %v2121, 4
        %v2144 = vsel %vm2140, %v2124, %v2127
        %v2145 = vsel %vm2143, %v2133, 2102212464
        %v2146 = vsel %vm2142, %v2130, %v2145
        %v2147 = vsel %vm2141, %v2144, %v2146
        %v2148 = vsel %vm2140, %v2127, %v2130
        %v2149 = vsel %vm2143, %v2136, 920167782
        %v2150 = vsel %vm2142, %v2133, %v2149
        %v2151 = vsel %vm2141, %v2148, %v2150
        %v2152 = vsel %vm2140, %v2130, %v2133
        %v2153 = vsel %vm2143, %v2139, 1326507024
        %v2154 = vsel %vm2142, %v2136, %v2153
        %v2155 = vsel %vm2141, %v2152, %v2154
        %v2156 = vshll.u32 %v2116, 8
        %v2157 = vand.u32 %v2156, 65535
        %v2158 = vshrl.u32 %v2156, 16
        %v2159 = vand.u32 %v2155, 65535
        %v2160 = vshrl.u32 %v2155, 16
        %v2161 = vmul.u32 %v2157, %v2159
        %v2162 = vmul.u32 %v2157, %v2160
        %v2163 = vmul.u32 %v2158, %v2159
        %v2164 = vmul.u32 %v2158, %v2160
        %v2165 = vshll.u32 %v2162, 16
        %v2166 = vshrl.u32 %v2162, 16
        %v2167 = vshll.u32 %v2163, 16
        %v2168 = vshrl.u32 %v2163, 16
        %vm2169 = vc.u32 %v2161, %v2165
        %v2170 = vsel %vm2169, 1, 0
        %v2171 = vadd.s32 %v2161, %v2165
        %v2172 = vadd.s32 %v2164, %v2170
        %vm2173 = vc.u32 %v2171, %v2167
        %v2174 = vsel %vm2173, 1, 0
        %v2175 = vadd.s32 %v2171, %v2167
        %v2176 = vadd.s32 %v2172, %v2174
        %v2177 = vadd.s32 %v2176, %v2166
        %v2178 = vadd.s32 %v2177, %v2168
        %v2179 = vand.u32 %v2156, 65535
        %v2180 = vshrl.u32 %v2156, 16
        %v2181 = vand.u32 %v2151, 65535
        %v2182 = vshrl.u32 %v2151, 16
        %v2183 = vmul.u32 %v2179, %v2181
        %v2184 = vmul.u32 %v2179, %v2182
        %v2185 = vmul.u32 %v2180, %v2181
        %v2186 = vmul.u32 %v2180, %v2182
        %v2187 = vshll.u32 %v2184, 16
        %v2188 = vshrl.u32 %v2184, 16
        %v2189 = vshll.u32 %v2185, 16
        %v2190 = vshrl.u32 %v2185, 16
        %vm2191 = vc.u32 %v2183, %v2187
        %v2192 = vsel %vm2191, 1, 0
        %v2193 = vadd.s32 %v2183, %v2187
        %v2194 = vadd.s32 %v2186, %v2192
        %vm2195 = vc.u32 %v2193, %v2189
        %v2196 = vsel %vm2195, 1, 0
        %v2197 = vadd.s32 %v2193, %v2189
        %v2198 = vadd.s32 %v2194, %v2196
        %v2199 = vadd.s32 %v2198, %v2188
        %v2200 = vadd.s32 %v2199, %v2190
        %v2201 = vmul.u32 %v2156, %v2147
        %v2202 = vadd.s32 %v2178, %v2197
        %vm2203 = vc.u32 %v2178, %v2197
        %v2204 = vadd.s32 %v2200, 1
        %v2205 = vsel %vm2203, %v2204, %v2200
        %v2206 = vadd.s32 %v2201, %v2205
        %v2207 = vadd.s32 %v2206, 536870912
        %v2208 = vshrl.u32 %v2207, 30
        %v2209 = vshll.u32 %v2208, 30
        %v2210 = vsub.s32 %v2206, %v2209
        %vm2211 = vcmp.lt.s32.totalorder %v2210, 0
        %v2212 = vsub.s32 0, %v2210
        %v2213 = vsel %vm2211, %v2212, %v2210
        %v2214 = vclz %v2213
        %v2215 = vsub.s32 %v2214, 2
        %vm2216 = vcmp.gt.s32.totalorder 0, %v2215
        %v2217 = vsel %vm2216, 0, %v2215
        %v2218 = vsub.s32 32, %v2217
        %v2219 = vshll.u32 %v2210, %v2217
        %v2220 = vshrl.u32 %v2202, %v2218
        %v2221 = vor.u32 %v2219, %v2220
        %v2222 = vsub.s32 4294967266, %v2217
        %v2223 = vadd.s32 %v2222, 127
        %v2224 = vshll.u32 %v2223, 23
        %v2225 = vor.u32 4788187, %v2224
        %v2226 = vand.u32 2147483647, %v2225
        %v2228 = vcvt.s32.f32 %v2221
        %v2229 = vmul.f32 %v2228, %v2226
        %v2230 = vxor.u32 %v2229, 2147483648
        %v2231 = vsel %vm2110, %v2230, %v2229
        %v2232 = vsub.s32 4, %v2208
        %v2233 = vsel %vm2110, %v2232, %v2208
        %v2234 = vsel %vm2109, %v968, %v2231
        %v2235 = vsel %vm2109, 0, %v2233
        %v2236 = vmul.f32 %v2234, %v2234
        %v2237 = vmul.f32 %v2236, -0.001358992
        %v2238 = vadd.f32 %v2237, 0.041655596
        %v2239 = vmul.f32 %v2236, %v2238
        %v2240 = vadd.f32 %v2239, -0.4999988
        %v2241 = vmul.f32 %v2236, %v2240
        %v2242 = vadd.f32 1.0, %v2241
        %v2243 = vmul.f32 %v2234, %v2234
        %v2244 = vmul.f32 %v2243, -0.00019511016
        %v2245 = vadd.f32 %v2244, 0.008332121
        %v2246 = vmul.f32 %v2243, %v2245
        %v2247 = vadd.f32 %v2246, -0.16666654
        %v2248 = vmul.f32 %v2243, %v2247
        %v2249 = vadd.f32 %v2248, 1.0
        %v2250 = vmul.f32 %v2249, %v2234
        %vm2251 = vweird.f32 %v968
        %v2252 = vand.u32 %v2235, 3
        %vm2253 = vcmp.lt.s32.totalorder %v2252, 2
        %vm2254 = vcmp.eq.s32.totalorder %v2252, 0
        %v2255 = vxor.u32 %v2250, 2147483648
        %v2256 = vsel %vm2254, %v2242, %v2255
        %vm2257 = vcmp.eq.s32.totalorder %v2252, 2
        %v2258 = vxor.u32 %v2242, 2147483648
        %v2259 = vsel %vm2257, %v2258, %v2250
        %v2260 = vsel %vm2253, %v2256, %v2259
        %v2261 = vsel %vm2251, nan, %v2260
        %2264 = vrot.lane.b32.xlu0 %v2107, 92
        %v2265 = vpop.permute.xlu0 %2264
        %2266 = vrot.lane.b32.xlu0 %v2261, 92
        %v2267 = vpop.permute.xlu0 %2266
        %vm2270 = vcmask 1015520
        %2271 = vst.msk [vmem:[%s234] sm:$0xff] %vm2270, %v2265
        %2272 = vst.msk [vmem:[%s234 + $0x8] sm:$0xff] %vm2270, %v2267
        %v2273 = vcvt.s32.f32 %v639
        %v2274 = vcvt.s32.f32 %v640
        %2277 = vrot.lane.b32.xlu0 %v2273, 124
        %v2278 = vpop.permute.xlu0 %2277
        %2279 = vrot.lane.b32.xlu0 %v2274, 124
        %v2280 = vpop.permute.xlu0 %2279
        %vm2283 = vcmask 1048544
        %2284 = vst.msk [vmem:[%s234] sm:$0xff] %vm2283, %v2278
        %2285 = vst.msk [vmem:[%s234 + $0x8] sm:$0xff] %vm2283, %v2280
        %s2286 = sand.u32 %s142, 1
        %s2287 = scalar_lea.sflag [#allocation3], %s2286
        %s2288 = sand.u32 %s142, 1
        %s2289 = smul.addr %s2288, 16
        %s2290 = scalar_lea.vmem [#allocation2], %s2289
        // Predicated region
        $region41: #{tpu_custom_call.1} parent=39 // pred_check
          %p2291 = pneg %p152
        $region42: #{tpu_custom_call.1} parent=39 // pred_check_branch
          %2293 = sbr.rel (%p2291) target = $region44
        $region43: #{tpu_custom_call.1} parent=39 // pred_region
          %s2294 = smul.u32 2, %s19
          %2296 = vsyncadd %s2287, 0
          %s2297 = smul.addr %s2294, 8
          %s2298 = scalar_lea.hbm %s5, %s2297
          %s2299 = sshll.u32 %s2290, 4
          %s2300 = int_to_ptr.vmem [resolvable:$true] %s2299
          %s2301 = sshll.u32 %s2298, 4
          %s2302 = int_to_ptr.hbm [resolvable:$true] %s2301
          %2307 = dma.vmem_to_hbm [thread:$0]  %s2300, 256, %s2302, %s2287, 128, 128, 8
        $region44: #{tpu_custom_call.1} parent=39 // pred_fallthru
          _
      $region40: #{tpu_custom_call.1} parent=5 // pred_fallthru
        _
      %p2308 = scmp.le.s32.totalorder 2, %s14
      // Predicated region
      $region45: #{tpu_custom_call.1} parent=5 // pred_check
        %p2309 = pneg %p2308
      $region46: #{tpu_custom_call.1} parent=5 // pred_check_branch
        %2311 = sbr.rel (%p2309) target = $region48
      $region47: #{tpu_custom_call.1} parent=5 // pred_region
        %s2312 = ssub.s32 %s14, 2
        // Predicated region
        $region49: #{tpu_custom_call.1} parent=47 // pred_check
          %p2313 = pneg %p158
        $region50: #{tpu_custom_call.1} parent=47 // pred_check_branch
          %2315 = sbr.rel (%p2313) target = $region52
        $region51: #{tpu_custom_call.1} parent=47 // pred_region
          %s2316 = sand.u32 %s143, 1
          %s2317 = scalar_lea.sflag [#allocation3], %s2316
          %s2318 = sand.u32 %s143, 1
          %s2319 = smul.addr %s2318, 16
          %s2320 = scalar_lea.vmem [#allocation2], %s2319
          %2322 = dma.done %s2317, 256
        $region52: #{tpu_custom_call.1} parent=47 // pred_fallthru
          _
      $region48: #{tpu_custom_call.1} parent=5 // pred_fallthru
        _
    $region6: #{tpu_custom_call.1} parent=1 // loop_footer
      %s18 = sadd.s32 1, %s14
    $region7: #{tpu_custom_call.1} parent=1 // loop_footer_branch
      %13 = sbr.rel target = $region3
    $region8: #{tpu_custom_call.1} parent=1 // loop_exit
      _
    %2323 = vsyncpa [#allocation3], 1
    %s2324 = scalar_lea.sflag [#allocation3], 1
    %2325 = vsyncpa %s2324, 1

</llo_original>
